<compile_context>
chip_gen: v6e
topology: v6e:2x2x1
jax: 0.10.0
libtpu: 0.0.40
codegen_flags: <defaults>
</compile_context>

<pallas_src>
import jax
import jax.numpy as jnp
from jax.experimental import pallas as pl
from jax.experimental.pallas import tpu as pltpu

H_IN = W_IN = 13          # 13x13 -> conv(2x2) 12x12 -> maxpool(2) 6x6 -> 36 features
H_CONV = W_CONV = 12
H_POOL = W_POOL = 6
BN_EPS = 1e-5
LANE = 128
MAX_TILE = 1024


def _round_up(x, m):
    return (x + m - 1) // m * m


def _conv_relu_pool(conv_ref, x):
    """x: (13, 13, TN) f32 -> list of 6 pooled row slabs, each (6, TN) f32.

    H pooling uses free slab pair-maxes; W pooling uses two constant selection
    matmuls (even / odd columns) on the idle MXU plus one vector max, keeping the
    XLU / store slots free of sublane-granular shuffles.
    """
    w00 = conv_ref[0]
    w01 = conv_ref[1]
    w10 = conv_ref[2]
    w11 = conv_ref[3]
    cb = conv_ref[4]

    x0 = x[:, 0:W_CONV, :]            # (13, 12, TN), W taps at offset 0 (free slice)
    x1 = x[:, 1:W_IN, :]              # (13, 12, TN), one sublane shift, reused twice
    # slice-before-multiply: only the 12 needed H rows enter the VPU work.
    c = (w00 * x0[0:H_CONV] + w01 * x1[0:H_CONV]
         + w10 * x0[1:H_IN] + w11 * x1[1:H_IN] + cb)      # (12, 12, TN)
    c = jnp.maximum(c, 0.0)                               # ReLU

    # Constant 0/1 selection matrices picking even / odd W columns (exact).
    col = jax.lax.broadcasted_iota(jnp.int32, (H_POOL, W_CONV), 1)
    row = jax.lax.broadcasted_iota(jnp.int32, (H_POOL, W_CONV), 0)
    sel_e = (col == 2 * row).astype(jnp.float32)          # (6, 12)
    sel_o = (col == 2 * row + 1).astype(jnp.float32)      # (6, 12)

    rows = []
    for h in range(H_POOL):
        r = jnp.maximum(c[2 * h], c[2 * h + 1])           # (12, TN) H pair-max (free)
        e = jnp.dot(sel_e, r, preferred_element_type=jnp.float32)   # r[0::2] -> (6, TN)
        o = jnp.dot(sel_o, r, preferred_element_type=jnp.float32)   # r[1::2] -> (6, TN)
        rows.append(jnp.maximum(e, o))                    # 2x2 max-pool, row h
    return rows


def conv_pool_kernel(n_ref, conv_ref, x_ref, pooled_ref, stats_ref):
    """Pass 1: conv + relu + maxpool on a (13,13,TN) tile, plus BN partial stats."""
    tn = x_ref.shape[-1]
    rows = _conv_relu_pool(conv_ref, x_ref[...].astype(jnp.float32))

    s1 = None
    s2 = None
    for h, ph in enumerate(rows):
        pooled_ref[h] = ph.astype(pooled_ref.dtype)       # (6, TN) slab store
        ps = jnp.sum(ph, axis=0, keepdims=True)           # (1, TN)
        pq = jnp.sum(ph * ph, axis=0, keepdims=True)      # (1, TN)
        s1 = ps if s1 is None else s1 + ps
        s2 = pq if s2 is None else s2 + pq

    # Mask padded batch lanes (>= real n) out of the BatchNorm statistics.
    rem = n_ref[0] - pl.program_id(0) * tn
    lane = jax.lax.broadcasted_iota(jnp.int32, (1, tn), 1)
    valid = lane < rem
    stats_ref[0] = jnp.concatenate(
        [jnp.where(valid, s1, 0.0), jnp.where(valid, s2, 0.0)], axis=0)   # (2, TN)


def head_kernel(pooled_ref, w1_ref, b1_ref, w2_ref, b2_ref, o_ref):
    """Pass 2: fc1 (BN folded in) + ReLU + fc2 + sigmoid on a (36, TN) tile."""
    xn = pooled_ref[...].astype(jnp.float32)              # (36, TN)
    h = jnp.dot(w1_ref[...], xn, preferred_element_type=jnp.float32) + b1_ref[...]
    h = jnp.maximum(h, 0.0)                               # (100, TN)
    y = jnp.dot(w2_ref[...], h, preferred_element_type=jnp.float32) + b2_ref[...]
    # sigmoid; EUP approx reciprocal keeps the divide off the VPU slot.
    o_ref[...] = pl.reciprocal(1.0 + jnp.exp(-y), approx=True)           # (5, TN)


def fused_kernel(n_ref, conv_ref, bn_ref, x_ref, w1_ref, b1_ref, w2_ref, b2_ref, o_ref):
    """Small-batch fast path: whole forward in one kernel (pooled never leaves VMEM)."""
    tn = x_ref.shape[-1]
    rows = _conv_relu_pool(conv_ref, x_ref[...].astype(jnp.float32))
    pooled = jnp.concatenate(rows, axis=0)                # (36, TN) f32, VMEM-resident

    # Training-mode BatchNorm2d(1) statistics over the REAL batch (mask padding).
    lane = jax.lax.broadcasted_iota(jnp.int32, (1, tn), 1)
    valid = lane < n_ref[0]
    pm = jnp.where(valid, pooled, 0.0)
    cnt = 36.0 * n_ref[0].astype(jnp.float32)
    s1 = jnp.sum(jnp.sum(pm, axis=1, keepdims=True), axis=0, keepdims=True)      # (1,1)
    s2 = jnp.sum(jnp.sum(pm * pm, axis=1, keepdims=True), axis=0, keepdims=True)
    mean = s1 / cnt
    var = s2 / cnt - mean * mean
    scale = bn_ref[0] * jax.lax.rsqrt(var + BN_EPS)       # gamma / std
    shift = bn_ref[1] - mean * scale                      # beta - mean * gamma / std
    xn = pooled * scale + shift                           # (36, TN)

    h = jnp.dot(w1_ref[...], xn, preferred_element_type=jnp.float32) + b1_ref[...]
    h = jnp.maximum(h, 0.0)
    y = jnp.dot(w2_ref[...], h, preferred_element_type=jnp.float32) + b2_ref[...]
    o_ref[...] = pl.reciprocal(1.0 + jnp.exp(-y), approx=True)


def net_forward(x_nchw, params):
    n = x_nchw.shape[0]
    # bf16 cast fused INTO the NCHW -> (H, W, N) transpose: the materialized
    # intermediate and the kernel read are bf16 (halves x HBM traffic).  Best case is
    # to accept x already as (13, 13, N) bf16 from the caller and skip this entirely.
    x = jnp.transpose(x_nchw[:, 0, :, :].astype(jnp.bfloat16), (1, 2, 0))

    n128 = _round_up(n, LANE)
    cparams = pltpu.CompilerParams(
        dimension_semantics=("parallel",),
        vmem_limit_bytes=32 * 1024 * 1024,
    )
    smem = pl.BlockSpec(memory_space=pltpu.MemorySpace.SMEM)
    n_arr = jnp.array([n], jnp.int32)

    if n128 <= LANE:
        # ---- small-batch fast path: one fused kernel, no pooled HBM round trip.
        n_pad = LANE
        x = jnp.pad(x, ((0, 0), (0, 0), (0, n_pad - n)))
        y = pl.pallas_call(
            fused_kernel,
            out_shape=jax.ShapeDtypeStruct((5, n_pad), jnp.float32),
            grid=(1,),
            in_specs=[
                smem, smem, smem,                                        # n, conv_p, bn_p
                pl.BlockSpec((H_IN, W_IN, n_pad), lambda i: (0, 0, 0)),
                pl.BlockSpec((100, 36), lambda i: (0, 0)),               # fc1 W, pinned
                pl.BlockSpec((100, 1), lambda i: (0, 0)),
                pl.BlockSpec((5, 100), lambda i: (0, 0)),                # fc2 W, pinned
                pl.BlockSpec((5, 1), lambda i: (0, 0)),
            ],
            out_specs=pl.BlockSpec((5, n_pad), lambda i: (0, 0)),
            compiler_params=cparams,
        )(n_arr, params["conv_p"], params["bn_p"], x,
          params["w1"], params["b1"], params["w2"], params["b2"])
        return jnp.transpose(y[:, :n]).reshape(n, 1, 5)

    # ---- batched path: big lane tiles (<=1024) and always >= 2 grid steps so the
    # "parallel" batch axis shards across both v7x TensorCores.
    tile_n = min(MAX_TILE, LANE * max(1, (n128 // 2) // LANE))
    n_pad = _round_up(n128, tile_n)
    if n_pad != n:
        x = jnp.pad(x, ((0, 0), (0, 0), (0, n_pad - n)))
    grid = (n_pad // tile_n,)

    # pass 1: conv + relu + maxpool -> pooled (6,6,N) bf16 + per-tile BN partials.
    pooled, stats = pl.pallas_call(
        conv_pool_kernel,
        out_shape=(
            jax.ShapeDtypeStruct((H_POOL, W_POOL, n_pad), jnp.bfloat16),
            jax.ShapeDtypeStruct((grid[0], 2, tile_n), jnp.float32),
        ),
        grid=grid,
        in_specs=[
            smem, smem,                                                  # n, conv_p
            pl.BlockSpec((H_IN, W_IN, tile_n), lambda i: (0, 0, i)),
        ],
        out_specs=(
            pl.BlockSpec((H_POOL, W_POOL, tile_n), lambda i: (0, 0, i)),
            pl.BlockSpec((1, 2, tile_n), lambda i: (i, 0, 0)),
        ),
        compiler_params=cparams,
    )(n_arr, params["conv_p"], x)

    # BatchNorm2d(1) training-mode stats over the REAL batch from the per-tile
    # partials (no pooled re-read); fold gamma/beta into fc1 on the host side.
    totals = jnp.sum(stats, axis=(0, 2))                  # (2,) = [sum, sum of squares]
    cnt = jnp.float32(36 * n)
    mean = totals[0] / cnt
    var = totals[1] / cnt - mean * mean
    gamma = params["bn_p"][0]
    beta = params["bn_p"][1]
    scale = gamma * jax.lax.rsqrt(var + BN_EPS)
    shift = beta - mean * scale
    w1_eff = params["w1"] * scale                                         # (100, 36)
    b1_eff = params["b1"] + shift * jnp.sum(params["w1"], axis=1, keepdims=True)

    pooled36 = pooled.reshape(H_POOL * W_POOL, n_pad)     # free, layout-identical reshape

    # pass 2: fc1 (BN folded) + relu + fc2 + sigmoid -> (5, N).
    y = pl.pallas_call(
        head_kernel,
        out_shape=jax.ShapeDtypeStruct((5, n_pad), jnp.float32),
        grid=grid,
        in_specs=[
            pl.BlockSpec((36, tile_n), lambda i: (0, i)),
            pl.BlockSpec((100, 36), lambda i: (0, 0)),                   # pinned weights
            pl.BlockSpec((100, 1), lambda i: (0, 0)),
            pl.BlockSpec((5, 100), lambda i: (0, 0)),
            pl.BlockSpec((5, 1), lambda i: (0, 0)),
        ],
        out_specs=pl.BlockSpec((5, tile_n), lambda i: (0, i)),
        compiler_params=cparams,
    )(pooled36, w1_eff, b1_eff, params["w2"], params["b2"])

    return jnp.transpose(y[:, :n]).reshape(n, 1, 5)       # PyTorch output (N, 1, 5)


def ref_forward(x_nchw, p, *, pooled_bf16):
    """Pure-JAX reference mirroring the kernel numerics (bf16 x at the boundary,
    f32 math, training-mode BN; pooled optionally bf16-rounded like the tiled path)."""
    xs = x_nchw[:, 0].astype(jnp.bfloat16).astype(jnp.float32)
    w = p["conv_p"][:4].reshape(2, 2)
    cb = p["conv_p"][4]
    c = (w[0, 0] * xs[:, :12, :12] + w[0, 1] * xs[:, :12, 1:]
         + w[1, 0] * xs[:, 1:, :12] + w[1, 1] * xs[:, 1:, 1:] + cb)
    c = jnp.maximum(c, 0.0)
    pooled = c.reshape(-1, 6, 2, 6, 2).max(axis=(2, 4))                  # (N, 6, 6)
    mean = pooled.mean()
    var = ((pooled - mean) ** 2).mean()
    flat = pooled.reshape(pooled.shape[0], 36)
    if pooled_bf16:  # the tiled path stores pooled to HBM as bf16
        flat = flat.astype(jnp.bfloat16).astype(jnp.float32)
    scale = p["bn_p"][0] * jax.lax.rsqrt(var + BN_EPS)
    shift = p["bn_p"][1] - mean * scale
    xn = flat * scale + shift
    h = jnp.maximum(xn @ p["w1"].T + p["b1"][:, 0], 0.0)
    y = jax.nn.sigmoid(h @ p["w2"].T + p["b2"][:, 0])
    return y.reshape(-1, 1, 5)


if __name__ == "__main__":
    ks = jax.random.split(jax.random.PRNGKey(0), 8)
    params = {
        # Conv2d(1,1,2): [w00, w01, w10, w11, bias], row-major (kh, kw)
        "conv_p": jnp.concatenate([
            jax.random.normal(ks[0], (4,), jnp.float32) * 0.5,
            jax.random.normal(ks[1], (1,), jnp.float32) * 0.1,
        ]),
        # BatchNorm2d(1) affine params (gamma, beta) — PyTorch default init
        "bn_p": jnp.array([1.0, 0.0], jnp.float32),
        # fc1: Linear(36, 100), stored (out, in) like PyTorch
        "w1": jax.random.normal(ks[2], (100, 36), jnp.float32) * (1.0 / 6.0),
        "b1": jax.random.normal(ks[3], (100, 1), jnp.float32) * 0.1,
        # fc2: Linear(100, 5), stored (out, in)
        "w2": jax.random.normal(ks[4], (5, 100), jnp.float32) * 0.1,
        "b2": jax.random.normal(ks[5], (5, 1), jnp.float32) * 0.1,
    }

    # small batch -> fused single-kernel fast path
    x_small = jax.random.normal(ks[6], (2, 1, H_IN, W_IN), jnp.float32)
    y_small = net_forward(x_small, params)
    jax.block_until_ready(y_small)
    assert y_small.shape == (2, 1, 5), y_small.shape
    assert jnp.allclose(y_small, ref_forward(x_small, params, pooled_bf16=False),
                        atol=2e-3, rtol=2e-3), "fused path mismatch vs reference"

    # larger batch -> two-pass tiled path (3 batch tiles, padded last tile)
    x_big = jax.random.normal(ks[7], (300, 1, H_IN, W_IN), jnp.float32)
    y_big = net_forward(x_big, params)
    jax.block_until_ready(y_big)
    assert y_big.shape == (300, 1, 5), y_big.shape
    assert jnp.allclose(y_big, ref_forward(x_big, params, pooled_bf16=True),
                        atol=2e-3, rtol=2e-3), "tiled path mismatch vs reference"

    print("KERNEL_OK")
</pallas_src>

<mosaic_0001>
module attributes {stable_mosaic.version = 11 : i64} {
  func.func @fused_kernel(%arg0: i32, %arg1: memref<1xi32, #tpu.memory_space<smem>>, %arg2: memref<5xf32, #tpu.memory_space<smem>>, %arg3: memref<2xf32, #tpu.memory_space<smem>>, %arg4: memref<13x13x128xbf16, #tpu.memory_space<vmem>>, %arg5: memref<100x36xf32, #tpu.memory_space<vmem>>, %arg6: memref<100x1xf32, #tpu.memory_space<vmem>>, %arg7: memref<5x100xf32, #tpu.memory_space<vmem>>, %arg8: memref<5x1xf32, #tpu.memory_space<vmem>>, %arg9: memref<5x128xf32, #tpu.memory_space<vmem>>) attributes {dimension_semantics = [#tpu.dimension_semantics<parallel>], iteration_bounds = array<i64: 1>, scalar_prefetch = 0 : i64, scratch_operands = 0 : i64, tpu.core_type = #tpu.core_type<tc>, window_params = [{transform_indices = @transform_0, window_bounds = array<i64: 1>}, {transform_indices = @transform_1, window_bounds = array<i64: 5>}, {transform_indices = @transform_2, window_bounds = array<i64: 2>}, {pipeline_mode = #tpu.pipeline_mode<synchronous>, transform_indices = @transform_3, window_bounds = array<i64: 13, 13, 128>}, {pipeline_mode = #tpu.pipeline_mode<synchronous>, transform_indices = @transform_4, window_bounds = array<i64: 100, 36>}, {pipeline_mode = #tpu.pipeline_mode<synchronous>, transform_indices = @transform_5, window_bounds = array<i64: 100, 1>}, {pipeline_mode = #tpu.pipeline_mode<synchronous>, transform_indices = @transform_6, window_bounds = array<i64: 5, 100>}, {pipeline_mode = #tpu.pipeline_mode<synchronous>, transform_indices = @transform_7, window_bounds = array<i64: 5, 1>}, {pipeline_mode = #tpu.pipeline_mode<synchronous>, transform_indices = @transform_8, window_bounds = array<i64: 5, 128>}]} {
    %c0 = arith.constant 0 : index
    %c0_0 = arith.constant 0 : index
    %c0_1 = arith.constant 0 : index
    %0 = vector.load %arg4[%c0, %c0_0, %c0_1] : memref<13x13x128xbf16, #tpu.memory_space<vmem>>, vector<13x13x128xbf16>
    %1 = arith.extf %0 : vector<13x13x128xbf16> to vector<13x13x128xf32>
    %c0_2 = arith.constant 0 : index
    %2 = memref.load %arg2[%c0_2] : memref<5xf32, #tpu.memory_space<smem>>
    %c1 = arith.constant 1 : index
    %3 = memref.load %arg2[%c1] : memref<5xf32, #tpu.memory_space<smem>>
    %c2 = arith.constant 2 : index
    %4 = memref.load %arg2[%c2] : memref<5xf32, #tpu.memory_space<smem>>
    %c3 = arith.constant 3 : index
    %5 = memref.load %arg2[%c3] : memref<5xf32, #tpu.memory_space<smem>>
    %c4 = arith.constant 4 : index
    %6 = memref.load %arg2[%c4] : memref<5xf32, #tpu.memory_space<smem>>
    %7 = vector.extract_strided_slice %1 {offsets = [0, 0, 0], sizes = [13, 12, 128], strides = [1, 1, 1]} : vector<13x13x128xf32> to vector<13x12x128xf32>
    %8 = vector.extract_strided_slice %1 {offsets = [0, 1, 0], sizes = [13, 12, 128], strides = [1, 1, 1]} : vector<13x13x128xf32> to vector<13x12x128xf32>
    %9 = vector.extract_strided_slice %7 {offsets = [0, 0, 0], sizes = [12, 12, 128], strides = [1, 1, 1]} : vector<13x12x128xf32> to vector<12x12x128xf32>
    %10 = vector.broadcast %2 : f32 to vector<12x12x128xf32>
    %11 = arith.mulf %10, %9 : vector<12x12x128xf32>
    %12 = vector.extract_strided_slice %8 {offsets = [0, 0, 0], sizes = [12, 12, 128], strides = [1, 1, 1]} : vector<13x12x128xf32> to vector<12x12x128xf32>
    %13 = vector.broadcast %3 : f32 to vector<12x12x128xf32>
    %14 = arith.mulf %13, %12 : vector<12x12x128xf32>
    %15 = arith.addf %11, %14 : vector<12x12x128xf32>
    %16 = vector.extract_strided_slice %7 {offsets = [1, 0, 0], sizes = [12, 12, 128], strides = [1, 1, 1]} : vector<13x12x128xf32> to vector<12x12x128xf32>
    %17 = vector.broadcast %4 : f32 to vector<12x12x128xf32>
    %18 = arith.mulf %17, %16 : vector<12x12x128xf32>
    %19 = arith.addf %15, %18 : vector<12x12x128xf32>
    %20 = vector.extract_strided_slice %8 {offsets = [1, 0, 0], sizes = [12, 12, 128], strides = [1, 1, 1]} : vector<13x12x128xf32> to vector<12x12x128xf32>
    %21 = vector.broadcast %5 : f32 to vector<12x12x128xf32>
    %22 = arith.mulf %21, %20 : vector<12x12x128xf32>
    %23 = arith.addf %19, %22 : vector<12x12x128xf32>
    %24 = vector.broadcast %6 : f32 to vector<12x12x128xf32>
    %25 = arith.addf %23, %24 : vector<12x12x128xf32>
    %cst = arith.constant 0.000000e+00 : f32
    %26 = vector.broadcast %cst : f32 to vector<12x12x128xf32>
    %27 = arith.maximumf %25, %26 : vector<12x12x128xf32>
    %28 = tpu.iota {dimensions = array<i32: 1>} : vector<6x12xi32>
    %29 = tpu.iota {dimensions = array<i32: 0>} : vector<6x12xi32>
    %c2_i32 = arith.constant 2 : i32
    %30 = vector.broadcast %c2_i32 : i32 to vector<6x12xi32>
    %31 = arith.muli %30, %29 : vector<6x12xi32>
    %32 = arith.cmpi eq, %28, %31 : vector<6x12xi32>
    %33 = arith.extui %32 : vector<6x12xi1> to vector<6x12xi32>
    %34 = arith.sitofp %33 : vector<6x12xi32> to vector<6x12xf32>
    %c2_i32_3 = arith.constant 2 : i32
    %35 = vector.broadcast %c2_i32_3 : i32 to vector<6x12xi32>
    %36 = arith.muli %35, %29 : vector<6x12xi32>
    %c1_i32 = arith.constant 1 : i32
    %37 = vector.broadcast %c1_i32 : i32 to vector<6x12xi32>
    %38 = arith.addi %36, %37 : vector<6x12xi32>
    %39 = arith.cmpi eq, %28, %38 : vector<6x12xi32>
    %40 = arith.extui %39 : vector<6x12xi1> to vector<6x12xi32>
    %41 = arith.sitofp %40 : vector<6x12xi32> to vector<6x12xf32>
    %42 = vector.extract_strided_slice %27 {offsets = [0, 0, 0], sizes = [1, 12, 128], strides = [1, 1, 1]} : vector<12x12x128xf32> to vector<1x12x128xf32>
    %43 = vector.shape_cast %42 : vector<1x12x128xf32> to vector<12x128xf32>
    %44 = vector.extract_strided_slice %27 {offsets = [1, 0, 0], sizes = [1, 12, 128], strides = [1, 1, 1]} : vector<12x12x128xf32> to vector<1x12x128xf32>
    %45 = vector.shape_cast %44 : vector<1x12x128xf32> to vector<12x128xf32>
    %46 = arith.maximumf %43, %45 : vector<12x128xf32>
    %cst_4 = arith.constant dense<0.000000e+00> : vector<6x128xf32>
    %47 = tpu.matmul %34, %46, %cst_4 {dimension_numbers = #tpu.dot_dimension_numbers<[1], [0], [0], [1], [0, 0, 1, 1], [], []>} : vector<6x12xf32>, vector<12x128xf32>, vector<6x128xf32> -> vector<6x128xf32>
    %cst_5 = arith.constant dense<0.000000e+00> : vector<6x128xf32>
    %48 = tpu.matmul %41, %46, %cst_5 {dimension_numbers = #tpu.dot_dimension_numbers<[1], [0], [0], [1], [0, 0, 1, 1], [], []>} : vector<6x12xf32>, vector<12x128xf32>, vector<6x128xf32> -> vector<6x128xf32>
    %49 = arith.maximumf %47, %48 : vector<6x128xf32>
    %50 = vector.extract_strided_slice %27 {offsets = [2, 0, 0], sizes = [1, 12, 128], strides = [1, 1, 1]} : vector<12x12x128xf32> to vector<1x12x128xf32>
    %51 = vector.shape_cast %50 : vector<1x12x128xf32> to vector<12x128xf32>
    %52 = vector.extract_strided_slice %27 {offsets = [3, 0, 0], sizes = [1, 12, 128], strides = [1, 1, 1]} : vector<12x12x128xf32> to vector<1x12x128xf32>
    %53 = vector.shape_cast %52 : vector<1x12x128xf32> to vector<12x128xf32>
    %54 = arith.maximumf %51, %53 : vector<12x128xf32>
    %cst_6 = arith.constant dense<0.000000e+00> : vector<6x128xf32>
    %55 = tpu.matmul %34, %54, %cst_6 {dimension_numbers = #tpu.dot_dimension_numbers<[1], [0], [0], [1], [0, 0, 1, 1], [], []>} : vector<6x12xf32>, vector<12x128xf32>, vector<6x128xf32> -> vector<6x128xf32>
    %cst_7 = arith.constant dense<0.000000e+00> : vector<6x128xf32>
    %56 = tpu.matmul %41, %54, %cst_7 {dimension_numbers = #tpu.dot_dimension_numbers<[1], [0], [0], [1], [0, 0, 1, 1], [], []>} : vector<6x12xf32>, vector<12x128xf32>, vector<6x128xf32> -> vector<6x128xf32>
    %57 = arith.maximumf %55, %56 : vector<6x128xf32>
    %58 = vector.extract_strided_slice %27 {offsets = [4, 0, 0], sizes = [1, 12, 128], strides = [1, 1, 1]} : vector<12x12x128xf32> to vector<1x12x128xf32>
    %59 = vector.shape_cast %58 : vector<1x12x128xf32> to vector<12x128xf32>
    %60 = vector.extract_strided_slice %27 {offsets = [5, 0, 0], sizes = [1, 12, 128], strides = [1, 1, 1]} : vector<12x12x128xf32> to vector<1x12x128xf32>
    %61 = vector.shape_cast %60 : vector<1x12x128xf32> to vector<12x128xf32>
    %62 = arith.maximumf %59, %61 : vector<12x128xf32>
    %cst_8 = arith.constant dense<0.000000e+00> : vector<6x128xf32>
    %63 = tpu.matmul %34, %62, %cst_8 {dimension_numbers = #tpu.dot_dimension_numbers<[1], [0], [0], [1], [0, 0, 1, 1], [], []>} : vector<6x12xf32>, vector<12x128xf32>, vector<6x128xf32> -> vector<6x128xf32>
    %cst_9 = arith.constant dense<0.000000e+00> : vector<6x128xf32>
    %64 = tpu.matmul %41, %62, %cst_9 {dimension_numbers = #tpu.dot_dimension_numbers<[1], [0], [0], [1], [0, 0, 1, 1], [], []>} : vector<6x12xf32>, vector<12x128xf32>, vector<6x128xf32> -> vector<6x128xf32>
    %65 = arith.maximumf %63, %64 : vector<6x128xf32>
    %66 = vector.extract_strided_slice %27 {offsets = [6, 0, 0], sizes = [1, 12, 128], strides = [1, 1, 1]} : vector<12x12x128xf32> to vector<1x12x128xf32>
    %67 = vector.shape_cast %66 : vector<1x12x128xf32> to vector<12x128xf32>
    %68 = vector.extract_strided_slice %27 {offsets = [7, 0, 0], sizes = [1, 12, 128], strides = [1, 1, 1]} : vector<12x12x128xf32> to vector<1x12x128xf32>
    %69 = vector.shape_cast %68 : vector<1x12x128xf32> to vector<12x128xf32>
    %70 = arith.maximumf %67, %69 : vector<12x128xf32>
    %cst_10 = arith.constant dense<0.000000e+00> : vector<6x128xf32>
    %71 = tpu.matmul %34, %70, %cst_10 {dimension_numbers = #tpu.dot_dimension_numbers<[1], [0], [0], [1], [0, 0, 1, 1], [], []>} : vector<6x12xf32>, vector<12x128xf32>, vector<6x128xf32> -> vector<6x128xf32>
    %cst_11 = arith.constant dense<0.000000e+00> : vector<6x128xf32>
    %72 = tpu.matmul %41, %70, %cst_11 {dimension_numbers = #tpu.dot_dimension_numbers<[1], [0], [0], [1], [0, 0, 1, 1], [], []>} : vector<6x12xf32>, vector<12x128xf32>, vector<6x128xf32> -> vector<6x128xf32>
    %73 = arith.maximumf %71, %72 : vector<6x128xf32>
    %74 = vector.extract_strided_slice %27 {offsets = [8, 0, 0], sizes = [1, 12, 128], strides = [1, 1, 1]} : vector<12x12x128xf32> to vector<1x12x128xf32>
    %75 = vector.shape_cast %74 : vector<1x12x128xf32> to vector<12x128xf32>
    %76 = vector.extract_strided_slice %27 {offsets = [9, 0, 0], sizes = [1, 12, 128], strides = [1, 1, 1]} : vector<12x12x128xf32> to vector<1x12x128xf32>
    %77 = vector.shape_cast %76 : vector<1x12x128xf32> to vector<12x128xf32>
    %78 = arith.maximumf %75, %77 : vector<12x128xf32>
    %cst_12 = arith.constant dense<0.000000e+00> : vector<6x128xf32>
    %79 = tpu.matmul %34, %78, %cst_12 {dimension_numbers = #tpu.dot_dimension_numbers<[1], [0], [0], [1], [0, 0, 1, 1], [], []>} : vector<6x12xf32>, vector<12x128xf32>, vector<6x128xf32> -> vector<6x128xf32>
    %cst_13 = arith.constant dense<0.000000e+00> : vector<6x128xf32>
    %80 = tpu.matmul %41, %78, %cst_13 {dimension_numbers = #tpu.dot_dimension_numbers<[1], [0], [0], [1], [0, 0, 1, 1], [], []>} : vector<6x12xf32>, vector<12x128xf32>, vector<6x128xf32> -> vector<6x128xf32>
    %81 = arith.maximumf %79, %80 : vector<6x128xf32>
    %82 = vector.extract_strided_slice %27 {offsets = [10, 0, 0], sizes = [1, 12, 128], strides = [1, 1, 1]} : vector<12x12x128xf32> to vector<1x12x128xf32>
    %83 = vector.shape_cast %82 : vector<1x12x128xf32> to vector<12x128xf32>
    %84 = vector.extract_strided_slice %27 {offsets = [11, 0, 0], sizes = [1, 12, 128], strides = [1, 1, 1]} : vector<12x12x128xf32> to vector<1x12x128xf32>
    %85 = vector.shape_cast %84 : vector<1x12x128xf32> to vector<12x128xf32>
    %86 = arith.maximumf %83, %85 : vector<12x128xf32>
    %cst_14 = arith.constant dense<0.000000e+00> : vector<6x128xf32>
    %87 = tpu.matmul %34, %86, %cst_14 {dimension_numbers = #tpu.dot_dimension_numbers<[1], [0], [0], [1], [0, 0, 1, 1], [], []>} : vector<6x12xf32>, vector<12x128xf32>, vector<6x128xf32> -> vector<6x128xf32>
    %cst_15 = arith.constant dense<0.000000e+00> : vector<6x128xf32>
    %88 = tpu.matmul %41, %86, %cst_15 {dimension_numbers = #tpu.dot_dimension_numbers<[1], [0], [0], [1], [0, 0, 1, 1], [], []>} : vector<6x12xf32>, vector<12x128xf32>, vector<6x128xf32> -> vector<6x128xf32>
    %89 = arith.maximumf %87, %88 : vector<6x128xf32>
    %90 = tpu.concatenate %49, %57, %65, %73, %81, %89 in 0 : vector<6x128xf32>, vector<6x128xf32>, vector<6x128xf32>, vector<6x128xf32>, vector<6x128xf32>, vector<6x128xf32> -> vector<36x128xf32>
    %91 = tpu.iota {dimensions = array<i32: 1>} : vector<1x128xi32>
    %c0_16 = arith.constant 0 : index
    %92 = memref.load %arg1[%c0_16] : memref<1xi32, #tpu.memory_space<smem>>
    %93 = vector.broadcast %92 : i32 to vector<1x128xi32>
    %94 = arith.cmpi slt, %91, %93 : vector<1x128xi32>
    %cst_17 = arith.constant 0.000000e+00 : f32
    %95 = vector.shape_cast %94 : vector<1x128xi1> to vector<1x128xi1>
    %96 = vector.broadcast %95 : vector<1x128xi1> to vector<36x128xi1>
    %97 = vector.broadcast %cst_17 : f32 to vector<36x128xf32>
    %98 = arith.select %96, %90, %97 : vector<36x128xi1>, vector<36x128xf32>
    %c0_18 = arith.constant 0 : index
    %99 = memref.load %arg1[%c0_18] : memref<1xi32, #tpu.memory_space<smem>>
    %100 = arith.sitofp %99 : i32 to f32
    %cst_19 = arith.constant 3.600000e+01 : f32
    %101 = arith.mulf %cst_19, %100 : f32
    %cst_20 = arith.constant dense<0.000000e+00> : vector<36xf32>
    %102 = vector.multi_reduction <add>, %98, %cst_20 [1] : vector<36x128xf32> to vector<36xf32>
    %103 = vector.shape_cast %102 : vector<36xf32> to vector<36x1xf32>
    %cst_21 = arith.constant dense<0.000000e+00> : vector<1xf32>
    %104 = vector.multi_reduction <add>, %103, %cst_21 [0] : vector<36x1xf32> to vector<1xf32>
    %105 = vector.shape_cast %104 : vector<1xf32> to vector<1x1xf32>
    %106 = arith.mulf %98, %98 : vector<36x128xf32>
    %cst_22 = arith.constant dense<0.000000e+00> : vector<36xf32>
    %107 = vector.multi_reduction <add>, %106, %cst_22 [1] : vector<36x128xf32> to vector<36xf32>
    %108 = vector.shape_cast %107 : vector<36xf32> to vector<36x1xf32>
    %cst_23 = arith.constant dense<0.000000e+00> : vector<1xf32>
    %109 = vector.multi_reduction <add>, %108, %cst_23 [0] : vector<36x1xf32> to vector<1xf32>
    %110 = vector.shape_cast %109 : vector<1xf32> to vector<1x1xf32>
    %111 = vector.broadcast %101 : f32 to vector<1x1xf32>
    %112 = arith.divf %105, %111 : vector<1x1xf32>
    %113 = vector.broadcast %101 : f32 to vector<1x1xf32>
    %114 = arith.divf %110, %113 : vector<1x1xf32>
    %115 = arith.mulf %112, %112 : vector<1x1xf32>
    %116 = arith.subf %114, %115 : vector<1x1xf32>
    %c0_24 = arith.constant 0 : index
    %117 = memref.load %arg3[%c0_24] : memref<2xf32, #tpu.memory_space<smem>>
    %cst_25 = arith.constant 9.99999974E-6 : f32
    %118 = vector.broadcast %cst_25 : f32 to vector<1x1xf32>
    %119 = arith.addf %116, %118 : vector<1x1xf32>
    %120 = math.rsqrt %119 : vector<1x1xf32>
    %121 = vector.broadcast %117 : f32 to vector<1x1xf32>
    %122 = arith.mulf %121, %120 : vector<1x1xf32>
    %c1_26 = arith.constant 1 : index
    %123 = memref.load %arg3[%c1_26] : memref<2xf32, #tpu.memory_space<smem>>
    %124 = arith.mulf %112, %122 : vector<1x1xf32>
    %125 = vector.broadcast %123 : f32 to vector<1x1xf32>
    %126 = arith.subf %125, %124 : vector<1x1xf32>
    %127 = vector.broadcast %122 : vector<1x1xf32> to vector<36x128xf32>
    %128 = arith.mulf %90, %127 : vector<36x128xf32>
    %129 = vector.broadcast %126 : vector<1x1xf32> to vector<36x128xf32>
    %130 = arith.addf %128, %129 : vector<36x128xf32>
    %c0_27 = arith.constant 0 : index
    %c0_28 = arith.constant 0 : index
    %131 = vector.load %arg5[%c0_27, %c0_28] : memref<100x36xf32, #tpu.memory_space<vmem>>, vector<100x36xf32>
    %cst_29 = arith.constant dense<0.000000e+00> : vector<100x128xf32>
    %132 = tpu.matmul %131, %130, %cst_29 {dimension_numbers = #tpu.dot_dimension_numbers<[1], [0], [0], [1], [0, 0, 1, 1], [], []>} : vector<100x36xf32>, vector<36x128xf32>, vector<100x128xf32> -> vector<100x128xf32>
    %c0_30 = arith.constant 0 : index
    %c0_31 = arith.constant 0 : index
    %133 = vector.load %arg6[%c0_30, %c0_31] : memref<100x1xf32, #tpu.memory_space<vmem>>, vector<100x1xf32>
    %134 = vector.broadcast %133 : vector<100x1xf32> to vector<100x128xf32>
    %135 = arith.addf %132, %134 : vector<100x128xf32>
    %cst_32 = arith.constant 0.000000e+00 : f32
    %136 = vector.broadcast %cst_32 : f32 to vector<100x128xf32>
    %137 = arith.maximumf %135, %136 : vector<100x128xf32>
    %c0_33 = arith.constant 0 : index
    %c0_34 = arith.constant 0 : index
    %138 = vector.load %arg7[%c0_33, %c0_34] : memref<5x100xf32, #tpu.memory_space<vmem>>, vector<5x100xf32>
    %cst_35 = arith.constant dense<0.000000e+00> : vector<5x128xf32>
    %139 = tpu.matmul %138, %137, %cst_35 {dimension_numbers = #tpu.dot_dimension_numbers<[1], [0], [0], [1], [0, 0, 1, 1], [], []>} : vector<5x100xf32>, vector<100x128xf32>, vector<5x128xf32> -> vector<5x128xf32>
    %c0_36 = arith.constant 0 : index
    %c0_37 = arith.constant 0 : index
    %140 = vector.load %arg8[%c0_36, %c0_37] : memref<5x1xf32, #tpu.memory_space<vmem>>, vector<5x1xf32>
    %141 = vector.broadcast %140 : vector<5x1xf32> to vector<5x128xf32>
    %142 = arith.addf %139, %141 : vector<5x128xf32>
    %cst_38 = arith.constant 0.000000e+00 : f32
    %143 = vector.broadcast %cst_38 : f32 to vector<5x128xf32>
    %144 = arith.subf %143, %142 : vector<5x128xf32>
    %145 = math.exp %144 : vector<5x128xf32>
    %cst_39 = arith.constant 1.000000e+00 : f32
    %146 = vector.broadcast %cst_39 : f32 to vector<5x128xf32>
    %147 = arith.addf %146, %145 : vector<5x128xf32>
    %148 = tpu.reciprocal %147 {approx = true} : vector<5x128xf32> -> vector<5x128xf32>
    %c0_40 = arith.constant 0 : index
    %c0_41 = arith.constant 0 : index
    %149 = vector.load %arg9[%c0_40, %c0_41] : memref<5x128xf32, #tpu.memory_space<vmem>>, vector<5x128xf32>
    tpu.vector_store %arg9[%c0_40, %c0_41], %148 {strides = array<i32>} : memref<5x128xf32, #tpu.memory_space<vmem>>, vector<5x128xf32>,
    return
  }
  func.func @transform_0(%arg0: i32) -> i32 {
    %c0_i32 = arith.constant 0 : i32
    %c0_i32_0 = arith.constant 0 : i32
    return %c0_i32 : i32
  }
  func.func @transform_1(%arg0: i32) -> i32 {
    %c0_i32 = arith.constant 0 : i32
    %c0_i32_0 = arith.constant 0 : i32
    return %c0_i32 : i32
  }
  func.func @transform_2(%arg0: i32) -> i32 {
    %c0_i32 = arith.constant 0 : i32
    %c0_i32_0 = arith.constant 0 : i32
    return %c0_i32 : i32
  }
  func.func @transform_3(%arg0: i32) -> (i32, i32, i32) {
    %c0_i32 = arith.constant 0 : i32
    %c0_i32_0 = arith.constant 0 : i32
    %c0_i32_1 = arith.constant 0 : i32
    %c0_i32_2 = arith.constant 0 : i32
    return %c0_i32, %c0_i32_0, %c0_i32_1 : i32, i32, i32
  }
  func.func @transform_4(%arg0: i32) -> (i32, i32) {
    %c0_i32 = arith.constant 0 : i32
    %c0_i32_0 = arith.constant 0 : i32
    %c0_i32_1 = arith.constant 0 : i32
    return %c0_i32, %c0_i32_0 : i32, i32
  }
  func.func @transform_5(%arg0: i32) -> (i32, i32) {
    %c0_i32 = arith.constant 0 : i32
    %c0_i32_0 = arith.constant 0 : i32
    %c0_i32_1 = arith.constant 0 : i32
    return %c0_i32, %c0_i32_0 : i32, i32
  }
  func.func @transform_6(%arg0: i32) -> (i32, i32) {
    %c0_i32 = arith.constant 0 : i32
    %c0_i32_0 = arith.constant 0 : i32
    %c0_i32_1 = arith.constant 0 : i32
    return %c0_i32, %c0_i32_0 : i32, i32
  }
  func.func @transform_7(%arg0: i32) -> (i32, i32) {
    %c0_i32 = arith.constant 0 : i32
    %c0_i32_0 = arith.constant 0 : i32
    %c0_i32_1 = arith.constant 0 : i32
    return %c0_i32, %c0_i32_0 : i32, i32
  }
  func.func @transform_8(%arg0: i32) -> (i32, i32) {
    %c0_i32 = arith.constant 0 : i32
    %c0_i32_0 = arith.constant 0 : i32
    %c0_i32_1 = arith.constant 0 : i32
    return %c0_i32, %c0_i32_0 : i32, i32
  }
}

</mosaic_0001>

<llo_original>
// kernel: tpu_custom_call.1
$region0: #{tpu_custom_call.1}
  #allocation0 [shape = 'u32[]', space=smem, size = 0x4, offset = 0x4, fixed_abs, tag = 'smem constant byte address 0x4 - core index']
  #allocation1 [shape = 'u32[144,128]{1,0:T(1,128)}', space=vmem, size = 0x12000, scoped, tag = 'internal scratch']
  #allocation2 [shape = 's32[1]{0:T(128)S(6)}', space=smem, size = 0x200, scoped, tag = 'scoped memory for tpu_custom_call.1']
  %s0 = inlined_call_operand.<no memory space> [shape: s32[1], index: 0, kind: input, shape index: {}]
  %s1 = inlined_call_operand.vmem [shape: f32[5], index: 1, kind: input, shape index: {}]
  %s2 = inlined_call_operand.vmem [shape: f32[2], index: 2, kind: input, shape index: {}]
  %s3 = inlined_call_operand.vmem [shape: bf16[13,13,128], index: 3, kind: input, shape index: {}]
  %s4 = inlined_call_operand.vmem [shape: f32[100,36], index: 4, kind: input, shape index: {}]
  %s5 = inlined_call_operand.vmem [shape: f32[100,1], index: 5, kind: input, shape index: {}]
  %s6 = inlined_call_operand.vmem [shape: f32[5,100], index: 6, kind: input, shape index: {}]
  %s7 = inlined_call_operand.vmem [shape: f32[5,1], index: 7, kind: input, shape index: {}]
  %s8 = inlined_call_operand.hbm [shape: f32[5,128], index: 8, kind: output, shape index: {}]
  %s9 = sld [smem:[#allocation0]]
  $region50: #{tpu_custom_call.1} parent=0
    _
  %s11 = ssub.s32 1, %s9
  %s12 = scalar_select 0, %s11, %s9
  %13 = sst [smem:[#allocation2]] %s0
  $region1: #{tpu_custom_call.1} parent=0
    #allocation3 [shape = 'u8[512]{0}', space=smem, size = 0x200, scoped, tag = 'input window, operand 1, single buffered']
    #allocation4 [shape = 's32[1]{0}', space=sflag, size = 0x4, scoped, tag = 'scoped memory for tpu_custom_call.1']
    #allocation5 [shape = 's32[1]{0}', space=sflag, size = 0x4, scoped, tag = 'scoped memory for tpu_custom_call.1']
    #allocation6 [shape = 'u8[512]{0}', space=smem, size = 0x200, scoped, tag = 'input window, operand 2, single buffered']
    #allocation7 [shape = 's32[1]{0}', space=sflag, size = 0x4, scoped, tag = 'scoped memory for tpu_custom_call.1']
    #allocation8 [shape = 'u8[4096]{0}', space=vmem, size = 0x1000, scoped, tag = 'output window, operand 0, single buffered']
    %14 = vsyncpa [#allocation5], 0
    %15 = vsyncpa [#allocation7], 0
    %16 = vsyncpa [#allocation4], 0
    // Predicated region
    $region2: #{tpu_custom_call.1} parent=1 // pred_check
      _
    $region3: #{tpu_custom_call.1} parent=1 // pred_check_branch
      %18 = sbr.rel (0) target = $region5
    $region4: #{tpu_custom_call.1} parent=1 // pred_region
      _
    $region5: #{tpu_custom_call.1} parent=1 // pred_fallthru
      _
    // Predicated region
    $region6: #{tpu_custom_call.1} parent=1 // pred_check
      _
    $region7: #{tpu_custom_call.1} parent=1 // pred_check_branch
      %20 = sbr.rel (0) target = $region9
    $region8: #{tpu_custom_call.1} parent=1 // pred_region
      %s22 = ssub.s32 16, 16
      %23 = vsyncadd [#allocation5], %s22
      %s25 = sshll.u32 %s1, 4
      %s26 = int_to_ptr.vmem [resolvable:$true] %s25
      %28 = dma.vmem_to_smem %s26, 16, [#allocation3], [#allocation5]
    $region9: #{tpu_custom_call.1} parent=1 // pred_fallthru
      _
    // Predicated region
    $region10: #{tpu_custom_call.1} parent=1 // pred_check
      _
    $region11: #{tpu_custom_call.1} parent=1 // pred_check_branch
      %30 = sbr.rel (0) target = $region13
    $region12: #{tpu_custom_call.1} parent=1 // pred_region
      %s32 = ssub.s32 16, 16
      %33 = vsyncadd [#allocation7], %s32
      %s35 = sshll.u32 %s2, 4
      %s36 = int_to_ptr.vmem [resolvable:$true] %s35
      %38 = dma.vmem_to_smem %s36, 16, [#allocation6], [#allocation7]
    $region13: #{tpu_custom_call.1} parent=1 // pred_fallthru
      _
    // Predicated region
    $region14: #{tpu_custom_call.1} parent=1 // pred_check
      _
    $region15: #{tpu_custom_call.1} parent=1 // pred_check_branch
      %40 = sbr.rel (0) target = $region17
    $region16: #{tpu_custom_call.1} parent=1 // pred_region
      _
    $region17: #{tpu_custom_call.1} parent=1 // pred_fallthru
      _
    // Predicated region
    $region18: #{tpu_custom_call.1} parent=1 // pred_check
      _
    $region19: #{tpu_custom_call.1} parent=1 // pred_check_branch
      %42 = sbr.rel (0) target = $region21
    $region20: #{tpu_custom_call.1} parent=1 // pred_region
      _
    $region21: #{tpu_custom_call.1} parent=1 // pred_fallthru
      _
    // Predicated region
    $region22: #{tpu_custom_call.1} parent=1 // pred_check
      _
    $region23: #{tpu_custom_call.1} parent=1 // pred_check_branch
      %44 = sbr.rel (0) target = $region25
    $region24: #{tpu_custom_call.1} parent=1 // pred_region
      _
    $region25: #{tpu_custom_call.1} parent=1 // pred_fallthru
      _
    // Predicated region
    $region26: #{tpu_custom_call.1} parent=1 // pred_check
      _
    $region27: #{tpu_custom_call.1} parent=1 // pred_check_branch
      %46 = sbr.rel (0) target = $region29
    $region28: #{tpu_custom_call.1} parent=1 // pred_region
      _
    $region29: #{tpu_custom_call.1} parent=1 // pred_fallthru
      _
    // Predicated region
    $region30: #{tpu_custom_call.1} parent=1 // pred_check
      _
    $region31: #{tpu_custom_call.1} parent=1 // pred_check_branch
      %48 = sbr.rel (0) target = $region33
    $region32: #{tpu_custom_call.1} parent=1 // pred_region
      _
    $region33: #{tpu_custom_call.1} parent=1 // pred_fallthru
      _
    // Predicated region
    $region34: #{tpu_custom_call.1} parent=1 // pred_check
      _
    $region35: #{tpu_custom_call.1} parent=1 // pred_check_branch
      %50 = sbr.rel (0) target = $region37
    $region36: #{tpu_custom_call.1} parent=1 // pred_region
      %51 = dma.done [#allocation5], 16
    $region37: #{tpu_custom_call.1} parent=1 // pred_fallthru
      _
    // Predicated region
    $region38: #{tpu_custom_call.1} parent=1 // pred_check
      _
    $region39: #{tpu_custom_call.1} parent=1 // pred_check_branch
      %53 = sbr.rel (0) target = $region41
    $region40: #{tpu_custom_call.1} parent=1 // pred_region
      %54 = dma.done [#allocation7], 16
    $region41: #{tpu_custom_call.1} parent=1 // pred_fallthru
      _
    %55 = sfence
    %v56 = vld [vmem:[%s3] sm:$0xf]
    %v57 = vld [vmem:[%s3 + $0x4] sm:$0x7]
    %v58 = vld [vmem:[%s3 + $0x8] sm:$0xf]
    %v59 = vld [vmem:[%s3 + $0xc] sm:$0x7]
    %v60 = vld [vmem:[%s3 + $0x10] sm:$0xf]
    %v61 = vld [vmem:[%s3 + $0x14] sm:$0x7]
    %v62 = vld [vmem:[%s3 + $0x18] sm:$0xf]
    %v63 = vld [vmem:[%s3 + $0x1c] sm:$0x7]
    %v64 = vld [vmem:[%s3 + $0x20] sm:$0xf]
    %v65 = vld [vmem:[%s3 + $0x24] sm:$0x7]
    %v66 = vld [vmem:[%s3 + $0x28] sm:$0xf]
    %v67 = vld [vmem:[%s3 + $0x2c] sm:$0x7]
    %v68 = vld [vmem:[%s3 + $0x30] sm:$0xf]
    %v69 = vld [vmem:[%s3 + $0x34] sm:$0x7]
    %v70 = vld [vmem:[%s3 + $0x38] sm:$0xf]
    %v71 = vld [vmem:[%s3 + $0x3c] sm:$0x7]
    %v72 = vld [vmem:[%s3 + $0x40] sm:$0xf]
    %v73 = vld [vmem:[%s3 + $0x44] sm:$0x7]
    %v74 = vld [vmem:[%s3 + $0x48] sm:$0xf]
    %v75 = vld [vmem:[%s3 + $0x4c] sm:$0x7]
    %v76 = vld [vmem:[%s3 + $0x50] sm:$0xf]
    %v77 = vld [vmem:[%s3 + $0x54] sm:$0x7]
    %v78 = vld [vmem:[%s3 + $0x58] sm:$0xf]
    %v79 = vld [vmem:[%s3 + $0x5c] sm:$0x7]
    %v80 = vld [vmem:[%s3 + $0x60] sm:$0xf]
    %v81 = vld [vmem:[%s3 + $0x64] sm:$0x7]
    %v82 = vunpack.c.l.bf16 %v56
    %v83 = vunpack.c.l.bf16 %v57
    %v84 = vunpack.c.l.bf16 %v58
    %v85 = vunpack.c.l.bf16 %v59
    %v86 = vunpack.c.l.bf16 %v60
    %v87 = vunpack.c.l.bf16 %v61
    %v88 = vunpack.c.l.bf16 %v62
    %v89 = vunpack.c.l.bf16 %v63
    %v90 = vunpack.c.l.bf16 %v64
    %v91 = vunpack.c.l.bf16 %v65
    %v92 = vunpack.c.l.bf16 %v66
    %v93 = vunpack.c.l.bf16 %v67
    %v94 = vunpack.c.l.bf16 %v68
    %v95 = vunpack.c.l.bf16 %v69
    %v96 = vunpack.c.l.bf16 %v70
    %v97 = vunpack.c.l.bf16 %v71
    %v98 = vunpack.c.l.bf16 %v72
    %v99 = vunpack.c.l.bf16 %v73
    %v100 = vunpack.c.l.bf16 %v74
    %v101 = vunpack.c.l.bf16 %v75
    %v102 = vunpack.c.l.bf16 %v76
    %v103 = vunpack.c.l.bf16 %v77
    %v104 = vunpack.c.l.bf16 %v78
    %v105 = vunpack.c.l.bf16 %v79
    %v106 = vunpack.c.l.bf16 %v80
    %v107 = vunpack.c.l.bf16 %v81
    %s108 = sld [smem:[#allocation3]]
    %s109 = sld [smem:[#allocation3 + $0x1]]
    %s110 = sld [smem:[#allocation3 + $0x2]]
    %s111 = sld [smem:[#allocation3 + $0x3]]
    %s112 = sld [smem:[#allocation3 + $0x4]]
    %v113 = vstv %s108
    %v114 = vmul.f32 %v113, %v82
    %v115 = vmul.f32 %v113, %v83
    %v116 = vmul.f32 %v113, %v84
    %v117 = vmul.f32 %v113, %v85
    %v118 = vmul.f32 %v113, %v86
    %v119 = vmul.f32 %v113, %v87
    %v120 = vmul.f32 %v113, %v88
    %v121 = vmul.f32 %v113, %v89
    %v122 = vmul.f32 %v113, %v90
    %v123 = vmul.f32 %v113, %v91
    %v124 = vmul.f32 %v113, %v92
    %v125 = vmul.f32 %v113, %v93
    %v126 = vmul.f32 %v113, %v94
    %v127 = vmul.f32 %v113, %v95
    %v128 = vmul.f32 %v113, %v96
    %v129 = vmul.f32 %v113, %v97
    %v130 = vmul.f32 %v113, %v98
    %v131 = vmul.f32 %v113, %v99
    %v132 = vmul.f32 %v113, %v100
    %v133 = vmul.f32 %v113, %v101
    %v134 = vmul.f32 %v113, %v102
    %v135 = vmul.f32 %v113, %v103
    %v136 = vmul.f32 %v113, %v104
    %v137 = vmul.f32 %v113, %v105
    %v138 = vstv %s109
    %v139 = vmul.f32 %v138, %v82
    %v140 = vmul.f32 %v138, %v83
    %v141 = vmul.f32 %v138, %v84
    %v142 = vmul.f32 %v138, %v85
    %v143 = vmul.f32 %v138, %v86
    %v144 = vmul.f32 %v138, %v87
    %v145 = vmul.f32 %v138, %v88
    %v146 = vmul.f32 %v138, %v89
    %v147 = vmul.f32 %v138, %v90
    %v148 = vmul.f32 %v138, %v91
    %v149 = vmul.f32 %v138, %v92
    %v150 = vmul.f32 %v138, %v93
    %v151 = vmul.f32 %v138, %v94
    %v152 = vmul.f32 %v138, %v95
    %v153 = vmul.f32 %v138, %v96
    %v154 = vmul.f32 %v138, %v97
    %v155 = vmul.f32 %v138, %v98
    %v156 = vmul.f32 %v138, %v99
    %v157 = vmul.f32 %v138, %v100
    %v158 = vmul.f32 %v138, %v101
    %v159 = vmul.f32 %v138, %v102
    %v160 = vmul.f32 %v138, %v103
    %v161 = vmul.f32 %v138, %v104
    %v162 = vmul.f32 %v138, %v105
    %vm187 = vcmask 1046528
    %v188 = vrot.slane %v139, 1
    %v189 = vrot.slane %v140, 1
    %v190 = vsel %vm187, %v188, %v189
    %v191 = vrot.slane %v141, 1
    %v192 = vrot.slane %v142, 1
    %v193 = vsel %vm187, %v191, %v192
    %v194 = vrot.slane %v143, 1
    %v195 = vrot.slane %v144, 1
    %v196 = vsel %vm187, %v194, %v195
    %v197 = vrot.slane %v145, 1
    %v198 = vrot.slane %v146, 1
    %v199 = vsel %vm187, %v197, %v198
    %v200 = vrot.slane %v147, 1
    %v201 = vrot.slane %v148, 1
    %v202 = vsel %vm187, %v200, %v201
    %v203 = vrot.slane %v149, 1
    %v204 = vrot.slane %v150, 1
    %v205 = vsel %vm187, %v203, %v204
    %v206 = vrot.slane %v151, 1
    %v207 = vrot.slane %v152, 1
    %v208 = vsel %vm187, %v206, %v207
    %v209 = vrot.slane %v153, 1
    %v210 = vrot.slane %v154, 1
    %v211 = vsel %vm187, %v209, %v210
    %v212 = vrot.slane %v155, 1
    %v213 = vrot.slane %v156, 1
    %v214 = vsel %vm187, %v212, %v213
    %v215 = vrot.slane %v157, 1
    %v216 = vrot.slane %v158, 1
    %v217 = vsel %vm187, %v215, %v216
    %v218 = vrot.slane %v159, 1
    %v219 = vrot.slane %v160, 1
    %v220 = vsel %vm187, %v218, %v219
    %v221 = vrot.slane %v161, 1
    %v222 = vrot.slane %v162, 1
    %v223 = vsel %vm187, %v221, %v222
    %v248 = vadd.f32 %v114, %v190
    %v249 = vadd.f32 %v115, %v189
    %v250 = vadd.f32 %v116, %v193
    %v251 = vadd.f32 %v117, %v192
    %v252 = vadd.f32 %v118, %v196
    %v253 = vadd.f32 %v119, %v195
    %v254 = vadd.f32 %v120, %v199
    %v255 = vadd.f32 %v121, %v198
    %v256 = vadd.f32 %v122, %v202
    %v257 = vadd.f32 %v123, %v201
    %v258 = vadd.f32 %v124, %v205
    %v259 = vadd.f32 %v125, %v204
    %v260 = vadd.f32 %v126, %v208
    %v261 = vadd.f32 %v127, %v207
    %v262 = vadd.f32 %v128, %v211
    %v263 = vadd.f32 %v129, %v210
    %v264 = vadd.f32 %v130, %v214
    %v265 = vadd.f32 %v131, %v213
    %v266 = vadd.f32 %v132, %v217
    %v267 = vadd.f32 %v133, %v216
    %v268 = vadd.f32 %v134, %v220
    %v269 = vadd.f32 %v135, %v219
    %v270 = vadd.f32 %v136, %v223
    %v271 = vadd.f32 %v137, %v222
    %v272 = vstv %s110
    %v273 = vmul.f32 %v272, %v84
    %v274 = vmul.f32 %v272, %v85
    %v275 = vmul.f32 %v272, %v86
    %v276 = vmul.f32 %v272, %v87
    %v277 = vmul.f32 %v272, %v88
    %v278 = vmul.f32 %v272, %v89
    %v279 = vmul.f32 %v272, %v90
    %v280 = vmul.f32 %v272, %v91
    %v281 = vmul.f32 %v272, %v92
    %v282 = vmul.f32 %v272, %v93
    %v283 = vmul.f32 %v272, %v94
    %v284 = vmul.f32 %v272, %v95
    %v285 = vmul.f32 %v272, %v96
    %v286 = vmul.f32 %v272, %v97
    %v287 = vmul.f32 %v272, %v98
    %v288 = vmul.f32 %v272, %v99
    %v289 = vmul.f32 %v272, %v100
    %v290 = vmul.f32 %v272, %v101
    %v291 = vmul.f32 %v272, %v102
    %v292 = vmul.f32 %v272, %v103
    %v293 = vmul.f32 %v272, %v104
    %v294 = vmul.f32 %v272, %v105
    %v295 = vmul.f32 %v272, %v106
    %v296 = vmul.f32 %v272, %v107
    %v297 = vadd.f32 %v248, %v273
    %v298 = vadd.f32 %v249, %v274
    %v299 = vadd.f32 %v250, %v275
    %v300 = vadd.f32 %v251, %v276
    %v301 = vadd.f32 %v252, %v277
    %v302 = vadd.f32 %v253, %v278
    %v303 = vadd.f32 %v254, %v279
    %v304 = vadd.f32 %v255, %v280
    %v305 = vadd.f32 %v256, %v281
    %v306 = vadd.f32 %v257, %v282
    %v307 = vadd.f32 %v258, %v283
    %v308 = vadd.f32 %v259, %v284
    %v309 = vadd.f32 %v260, %v285
    %v310 = vadd.f32 %v261, %v286
    %v311 = vadd.f32 %v262, %v287
    %v312 = vadd.f32 %v263, %v288
    %v313 = vadd.f32 %v264, %v289
    %v314 = vadd.f32 %v265, %v290
    %v315 = vadd.f32 %v266, %v291
    %v316 = vadd.f32 %v267, %v292
    %v317 = vadd.f32 %v268, %v293
    %v318 = vadd.f32 %v269, %v294
    %v319 = vadd.f32 %v270, %v295
    %v320 = vadd.f32 %v271, %v296
    %v321 = vstv %s111
    %v322 = vmul.f32 %v321, %v84
    %v323 = vmul.f32 %v321, %v85
    %v324 = vmul.f32 %v321, %v86
    %v325 = vmul.f32 %v321, %v87
    %v326 = vmul.f32 %v321, %v88
    %v327 = vmul.f32 %v321, %v89
    %v328 = vmul.f32 %v321, %v90
    %v329 = vmul.f32 %v321, %v91
    %v330 = vmul.f32 %v321, %v92
    %v331 = vmul.f32 %v321, %v93
    %v332 = vmul.f32 %v321, %v94
    %v333 = vmul.f32 %v321, %v95
    %v334 = vmul.f32 %v321, %v96
    %v335 = vmul.f32 %v321, %v97
    %v336 = vmul.f32 %v321, %v98
    %v337 = vmul.f32 %v321, %v99
    %v338 = vmul.f32 %v321, %v100
    %v339 = vmul.f32 %v321, %v101
    %v340 = vmul.f32 %v321, %v102
    %v341 = vmul.f32 %v321, %v103
    %v342 = vmul.f32 %v321, %v104
    %v343 = vmul.f32 %v321, %v105
    %v344 = vmul.f32 %v321, %v106
    %v345 = vmul.f32 %v321, %v107
    %v370 = vrot.slane %v322, 1
    %v371 = vrot.slane %v323, 1
    %v372 = vsel %vm187, %v370, %v371
    %v373 = vrot.slane %v324, 1
    %v374 = vrot.slane %v325, 1
    %v375 = vsel %vm187, %v373, %v374
    %v376 = vrot.slane %v326, 1
    %v377 = vrot.slane %v327, 1
    %v378 = vsel %vm187, %v376, %v377
    %v379 = vrot.slane %v328, 1
    %v380 = vrot.slane %v329, 1
    %v381 = vsel %vm187, %v379, %v380
    %v382 = vrot.slane %v330, 1
    %v383 = vrot.slane %v331, 1
    %v384 = vsel %vm187, %v382, %v383
    %v385 = vrot.slane %v332, 1
    %v386 = vrot.slane %v333, 1
    %v387 = vsel %vm187, %v385, %v386
    %v388 = vrot.slane %v334, 1
    %v389 = vrot.slane %v335, 1
    %v390 = vsel %vm187, %v388, %v389
    %v391 = vrot.slane %v336, 1
    %v392 = vrot.slane %v337, 1
    %v393 = vsel %vm187, %v391, %v392
    %v394 = vrot.slane %v338, 1
    %v395 = vrot.slane %v339, 1
    %v396 = vsel %vm187, %v394, %v395
    %v397 = vrot.slane %v340, 1
    %v398 = vrot.slane %v341, 1
    %v399 = vsel %vm187, %v397, %v398
    %v400 = vrot.slane %v342, 1
    %v401 = vrot.slane %v343, 1
    %v402 = vsel %vm187, %v400, %v401
    %v403 = vrot.slane %v344, 1
    %v404 = vrot.slane %v345, 1
    %v405 = vsel %vm187, %v403, %v404
    %v430 = vadd.f32 %v297, %v372
    %v431 = vadd.f32 %v298, %v371
    %v432 = vadd.f32 %v299, %v375
    %v433 = vadd.f32 %v300, %v374
    %v434 = vadd.f32 %v301, %v378
    %v435 = vadd.f32 %v302, %v377
    %v436 = vadd.f32 %v303, %v381
    %v437 = vadd.f32 %v304, %v380
    %v438 = vadd.f32 %v305, %v384
    %v439 = vadd.f32 %v306, %v383
    %v440 = vadd.f32 %v307, %v387
    %v441 = vadd.f32 %v308, %v386
    %v442 = vadd.f32 %v309, %v390
    %v443 = vadd.f32 %v310, %v389
    %v444 = vadd.f32 %v311, %v393
    %v445 = vadd.f32 %v312, %v392
    %v446 = vadd.f32 %v313, %v396
    %v447 = vadd.f32 %v314, %v395
    %v448 = vadd.f32 %v315, %v399
    %v449 = vadd.f32 %v316, %v398
    %v450 = vadd.f32 %v317, %v402
    %v451 = vadd.f32 %v318, %v401
    %v452 = vadd.f32 %v319, %v405
    %v453 = vadd.f32 %v320, %v404
    %v454 = vstv %s112
    %v455 = vadd.f32 %v430, %v454
    %v456 = vadd.f32 %v431, %v454
    %v457 = vadd.f32 %v432, %v454
    %v458 = vadd.f32 %v433, %v454
    %v459 = vadd.f32 %v434, %v454
    %v460 = vadd.f32 %v435, %v454
    %v461 = vadd.f32 %v436, %v454
    %v462 = vadd.f32 %v437, %v454
    %v463 = vadd.f32 %v438, %v454
    %v464 = vadd.f32 %v439, %v454
    %v465 = vadd.f32 %v440, %v454
    %v466 = vadd.f32 %v441, %v454
    %v467 = vadd.f32 %v442, %v454
    %v468 = vadd.f32 %v443, %v454
    %v469 = vadd.f32 %v444, %v454
    %v470 = vadd.f32 %v445, %v454
    %v471 = vadd.f32 %v446, %v454
    %v472 = vadd.f32 %v447, %v454
    %v473 = vadd.f32 %v448, %v454
    %v474 = vadd.f32 %v449, %v454
    %v475 = vadd.f32 %v450, %v454
    %v476 = vadd.f32 %v451, %v454
    %v477 = vadd.f32 %v452, %v454
    %v478 = vadd.f32 %v453, %v454
    %v479 = vmax.f32 %v455, 0.0
    %v480 = vmax.f32 %v456, 0.0
    %v481 = vmax.f32 %v457, 0.0
    %v482 = vmax.f32 %v458, 0.0
    %v483 = vmax.f32 %v459, 0.0
    %v484 = vmax.f32 %v460, 0.0
    %v485 = vmax.f32 %v461, 0.0
    %v486 = vmax.f32 %v462, 0.0
    %v487 = vmax.f32 %v463, 0.0
    %v488 = vmax.f32 %v464, 0.0
    %v489 = vmax.f32 %v465, 0.0
    %v490 = vmax.f32 %v466, 0.0
    %v491 = vmax.f32 %v467, 0.0
    %v492 = vmax.f32 %v468, 0.0
    %v493 = vmax.f32 %v469, 0.0
    %v494 = vmax.f32 %v470, 0.0
    %v495 = vmax.f32 %v471, 0.0
    %v496 = vmax.f32 %v472, 0.0
    %v497 = vmax.f32 %v473, 0.0
    %v498 = vmax.f32 %v474, 0.0
    %v499 = vmax.f32 %v475, 0.0
    %v500 = vmax.f32 %v476, 0.0
    %v501 = vmax.f32 %v477, 0.0
    %v502 = vmax.f32 %v478, 0.0
    %v503 = vlaneseq
    %v504 = vand.u32 %v503, 127
    %v505 = vlaneseq
    %v506 = vshrl.u32 %v505, 7
    %v507 = vmul.u32 %v506, 2
    %vm508 = vcmp.eq.s32.totalorder %v504, %v507
    %v509 = vsel %vm508, 1, 0
    %v510 = vcvt.s32.f32 %v509
    %v511 = vadd.s32 %v507, 1
    %vm512 = vcmp.eq.s32.totalorder %v504, %v511
    %v513 = vsel %vm512, 1, 0
    %v514 = vcvt.s32.f32 %v513
    %v515 = vmax.f32 %v479, %v481
    %v516 = vmax.f32 %v480, %v482
    %vm517 = vcmask 97280
    %v519 = vsel %vm517, %v510, 0
    %vm521 = vcmask 1043456
    %v523 = vsel %vm521, %v516, 0
    %525 = vmatprep.subr.mxu0 0.0
    %526 = vmatpush1.msra.mxu0 0.0
    %527 = vmatprep.subr.mxu0 0.0
    %528 = vmatpush1.msra.mxu0 0.0
    %529 = vmatprep.subr.mxu0 0.0
    %530 = vmatpush1.msra.mxu0 0.0
    %531 = vmatprep.subr.mxu0 0.0
    %532 = vmatpush1.msra.mxu0 0.0
    %533 = vmatprep.subr.mxu0 0.0
    %534 = vmatpush1.msra.mxu0 0.0
    %535 = vmatprep.subr.mxu0 0.0
    %536 = vmatpush1.msra.mxu0 0.0
    %537 = vmatprep.subr.mxu0 0.0
    %538 = vmatpush1.msra.mxu0 0.0
    %539 = vmatprep.subr.mxu0 0.0
    %540 = vmatpush1.msra.mxu0 0.0
    %541 = vmatprep.subr.mxu0 0.0
    %542 = vmatpush1.msra.mxu0 0.0
    %543 = vmatprep.subr.mxu0 0.0
    %544 = vmatpush1.msra.mxu0 0.0
    %545 = vmatprep.subr.mxu0 0.0
    %546 = vmatpush1.msra.mxu0 0.0
    %547 = vmatprep.subr.mxu0 0.0
    %548 = vmatpush1.msra.mxu0 0.0
    %549 = vmatprep.subr.mxu0 0.0
    %550 = vmatpush1.msra.mxu0 0.0
    %551 = vmatprep.subr.mxu0 0.0
    %552 = vmatpush1.msra.mxu0 0.0
    %553 = vmatprep.subr.mxu0 0.0
    %554 = vmatpush1.msra.mxu0 %v523
    %555 = vmatprep.subr.mxu0 0.0
    %556 = vmatpush1.msra.mxu0 %v515
    %557 = vmatprep.subr.mxu0 0.0
    %558 = vmatpush2.msra.mxu0 0.0
    %559 = vmatprep.subr.mxu0 0.0
    %560 = vmatpush2.msra.mxu0 0.0
    %561 = vmatprep.subr.mxu0 0.0
    %562 = vmatpush2.msra.mxu0 0.0
    %563 = vmatprep.subr.mxu0 0.0
    %564 = vmatpush2.msra.mxu0 0.0
    %565 = vmatprep.subr.mxu0 0.0
    %566 = vmatpush2.msra.mxu0 0.0
    %567 = vmatprep.subr.mxu0 0.0
    %568 = vmatpush2.msra.mxu0 0.0
    %569 = vmatprep.subr.mxu0 0.0
    %570 = vmatpush2.msra.mxu0 0.0
    %571 = vmatprep.subr.mxu0 0.0
    %572 = vmatpush2.msra.mxu0 0.0
    %573 = vmatprep.subr.mxu0 0.0
    %574 = vmatpush2.msra.mxu0 0.0
    %575 = vmatprep.subr.mxu0 0.0
    %576 = vmatpush2.msra.mxu0 0.0
    %577 = vmatprep.subr.mxu0 0.0
    %578 = vmatpush2.msra.mxu0 0.0
    %579 = vmatprep.subr.mxu0 0.0
    %580 = vmatpush2.msra.mxu0 0.0
    %581 = vmatprep.subr.mxu0 0.0
    %582 = vmatpush2.msra.mxu0 0.0
    %583 = vmatprep.subr.mxu0 0.0
    %584 = vmatpush2.msra.mxu0 0.0
    %585 = vmatprep.subr.mxu0 0.0
    %586 = vmatpush2.msra.mxu0 0.0
    %587 = vmatprep.subr.mxu0 0.0
    %588 = vmatpush2.msra.mxu0 0.0
    %589 = vmatprep.mubr.f32.mxu0 0.0
    %590 = vmatmul.mubr.f32.gmra.mxu0 %v519
    %v591 = vpop.f32.mrf.mxu0
    %v592 = vadd.f32 0.0, %v591
    %v593 = vpop.f32.mrf.mxu0
    %594 = vdwg.mxu0
    %v596 = vsel %vm517, %v514, 0
    %598 = vmatprep.subr.mxu0 0.0
    %599 = vmatpush1.msra.mxu0 0.0
    %600 = vmatprep.subr.mxu0 0.0
    %601 = vmatpush1.msra.mxu0 0.0
    %602 = vmatprep.subr.mxu0 0.0
    %603 = vmatpush1.msra.mxu0 0.0
    %604 = vmatprep.subr.mxu0 0.0
    %605 = vmatpush1.msra.mxu0 0.0
    %606 = vmatprep.subr.mxu0 0.0
    %607 = vmatpush1.msra.mxu0 0.0
    %608 = vmatprep.subr.mxu0 0.0
    %609 = vmatpush1.msra.mxu0 0.0
    %610 = vmatprep.subr.mxu0 0.0
    %611 = vmatpush1.msra.mxu0 0.0
    %612 = vmatprep.subr.mxu0 0.0
    %613 = vmatpush1.msra.mxu0 0.0
    %614 = vmatprep.subr.mxu0 0.0
    %615 = vmatpush1.msra.mxu0 0.0
    %616 = vmatprep.subr.mxu0 0.0
    %617 = vmatpush1.msra.mxu0 0.0
    %618 = vmatprep.subr.mxu0 0.0
    %619 = vmatpush1.msra.mxu0 0.0
    %620 = vmatprep.subr.mxu0 0.0
    %621 = vmatpush1.msra.mxu0 0.0
    %622 = vmatprep.subr.mxu0 0.0
    %623 = vmatpush1.msra.mxu0 0.0
    %624 = vmatprep.subr.mxu0 0.0
    %625 = vmatpush1.msra.mxu0 0.0
    %626 = vmatprep.subr.mxu0 0.0
    %627 = vmatpush1.msra.mxu0 %v523
    %628 = vmatprep.subr.mxu0 0.0
    %629 = vmatpush1.msra.mxu0 %v515
    %630 = vmatprep.subr.mxu0 0.0
    %631 = vmatpush2.msra.mxu0 0.0
    %632 = vmatprep.subr.mxu0 0.0
    %633 = vmatpush2.msra.mxu0 0.0
    %634 = vmatprep.subr.mxu0 0.0
    %635 = vmatpush2.msra.mxu0 0.0
    %636 = vmatprep.subr.mxu0 0.0
    %637 = vmatpush2.msra.mxu0 0.0
    %638 = vmatprep.subr.mxu0 0.0
    %639 = vmatpush2.msra.mxu0 0.0
    %640 = vmatprep.subr.mxu0 0.0
    %641 = vmatpush2.msra.mxu0 0.0
    %642 = vmatprep.subr.mxu0 0.0
    %643 = vmatpush2.msra.mxu0 0.0
    %644 = vmatprep.subr.mxu0 0.0
    %645 = vmatpush2.msra.mxu0 0.0
    %646 = vmatprep.subr.mxu0 0.0
    %647 = vmatpush2.msra.mxu0 0.0
    %648 = vmatprep.subr.mxu0 0.0
    %649 = vmatpush2.msra.mxu0 0.0
    %650 = vmatprep.subr.mxu0 0.0
    %651 = vmatpush2.msra.mxu0 0.0
    %652 = vmatprep.subr.mxu0 0.0
    %653 = vmatpush2.msra.mxu0 0.0
    %654 = vmatprep.subr.mxu0 0.0
    %655 = vmatpush2.msra.mxu0 0.0
    %656 = vmatprep.subr.mxu0 0.0
    %657 = vmatpush2.msra.mxu0 0.0
    %658 = vmatprep.subr.mxu0 0.0
    %659 = vmatpush2.msra.mxu0 0.0
    %660 = vmatprep.subr.mxu0 0.0
    %661 = vmatpush2.msra.mxu0 0.0
    %662 = vmatprep.mubr.f32.mxu0 0.0
    %663 = vmatmul.mubr.f32.gmra.mxu0 %v596
    %v664 = vpop.f32.mrf.mxu0
    %v665 = vadd.f32 0.0, %v664
    %v666 = vpop.f32.mrf.mxu0
    %667 = vdwg.mxu0
    %v668 = vmax.f32 %v592, %v665
    %v669 = vmax.f32 %v483, %v485
    %v670 = vmax.f32 %v484, %v486
    %v672 = vsel %vm521, %v670, 0
    %674 = vmatprep.subr.mxu0 0.0
    %675 = vmatpush1.msra.mxu0 0.0
    %676 = vmatprep.subr.mxu0 0.0
    %677 = vmatpush1.msra.mxu0 0.0
    %678 = vmatprep.subr.mxu0 0.0
    %679 = vmatpush1.msra.mxu0 0.0
    %680 = vmatprep.subr.mxu0 0.0
    %681 = vmatpush1.msra.mxu0 0.0
    %682 = vmatprep.subr.mxu0 0.0
    %683 = vmatpush1.msra.mxu0 0.0
    %684 = vmatprep.subr.mxu0 0.0
    %685 = vmatpush1.msra.mxu0 0.0
    %686 = vmatprep.subr.mxu0 0.0
    %687 = vmatpush1.msra.mxu0 0.0
    %688 = vmatprep.subr.mxu0 0.0
    %689 = vmatpush1.msra.mxu0 0.0
    %690 = vmatprep.subr.mxu0 0.0
    %691 = vmatpush1.msra.mxu0 0.0
    %692 = vmatprep.subr.mxu0 0.0
    %693 = vmatpush1.msra.mxu0 0.0
    %694 = vmatprep.subr.mxu0 0.0
    %695 = vmatpush1.msra.mxu0 0.0
    %696 = vmatprep.subr.mxu0 0.0
    %697 = vmatpush1.msra.mxu0 0.0
    %698 = vmatprep.subr.mxu0 0.0
    %699 = vmatpush1.msra.mxu0 0.0
    %700 = vmatprep.subr.mxu0 0.0
    %701 = vmatpush1.msra.mxu0 0.0
    %702 = vmatprep.subr.mxu0 0.0
    %703 = vmatpush1.msra.mxu0 %v672
    %704 = vmatprep.subr.mxu0 0.0
    %705 = vmatpush1.msra.mxu0 %v669
    %706 = vmatprep.subr.mxu0 0.0
    %707 = vmatpush2.msra.mxu0 0.0
    %708 = vmatprep.subr.mxu0 0.0
    %709 = vmatpush2.msra.mxu0 0.0
    %710 = vmatprep.subr.mxu0 0.0
    %711 = vmatpush2.msra.mxu0 0.0
    %712 = vmatprep.subr.mxu0 0.0
    %713 = vmatpush2.msra.mxu0 0.0
    %714 = vmatprep.subr.mxu0 0.0
    %715 = vmatpush2.msra.mxu0 0.0
    %716 = vmatprep.subr.mxu0 0.0
    %717 = vmatpush2.msra.mxu0 0.0
    %718 = vmatprep.subr.mxu0 0.0
    %719 = vmatpush2.msra.mxu0 0.0
    %720 = vmatprep.subr.mxu0 0.0
    %721 = vmatpush2.msra.mxu0 0.0
    %722 = vmatprep.subr.mxu0 0.0
    %723 = vmatpush2.msra.mxu0 0.0
    %724 = vmatprep.subr.mxu0 0.0
    %725 = vmatpush2.msra.mxu0 0.0
    %726 = vmatprep.subr.mxu0 0.0
    %727 = vmatpush2.msra.mxu0 0.0
    %728 = vmatprep.subr.mxu0 0.0
    %729 = vmatpush2.msra.mxu0 0.0
    %730 = vmatprep.subr.mxu0 0.0
    %731 = vmatpush2.msra.mxu0 0.0
    %732 = vmatprep.subr.mxu0 0.0
    %733 = vmatpush2.msra.mxu0 0.0
    %734 = vmatprep.subr.mxu0 0.0
    %735 = vmatpush2.msra.mxu0 0.0
    %736 = vmatprep.subr.mxu0 0.0
    %737 = vmatpush2.msra.mxu0 0.0
    %738 = vmatprep.mubr.f32.mxu0 0.0
    %739 = vmatmul.mubr.f32.gmra.mxu0 %v519
    %v740 = vpop.f32.mrf.mxu0
    %v741 = vadd.f32 0.0, %v740
    %v742 = vpop.f32.mrf.mxu0
    %743 = vdwg.mxu0
    %744 = vmatprep.subr.mxu0 0.0
    %745 = vmatpush1.msra.mxu0 0.0
    %746 = vmatprep.subr.mxu0 0.0
    %747 = vmatpush1.msra.mxu0 0.0
    %748 = vmatprep.subr.mxu0 0.0
    %749 = vmatpush1.msra.mxu0 0.0
    %750 = vmatprep.subr.mxu0 0.0
    %751 = vmatpush1.msra.mxu0 0.0
    %752 = vmatprep.subr.mxu0 0.0
    %753 = vmatpush1.msra.mxu0 0.0
    %754 = vmatprep.subr.mxu0 0.0
    %755 = vmatpush1.msra.mxu0 0.0
    %756 = vmatprep.subr.mxu0 0.0
    %757 = vmatpush1.msra.mxu0 0.0
    %758 = vmatprep.subr.mxu0 0.0
    %759 = vmatpush1.msra.mxu0 0.0
    %760 = vmatprep.subr.mxu0 0.0
    %761 = vmatpush1.msra.mxu0 0.0
    %762 = vmatprep.subr.mxu0 0.0
    %763 = vmatpush1.msra.mxu0 0.0
    %764 = vmatprep.subr.mxu0 0.0
    %765 = vmatpush1.msra.mxu0 0.0
    %766 = vmatprep.subr.mxu0 0.0
    %767 = vmatpush1.msra.mxu0 0.0
    %768 = vmatprep.subr.mxu0 0.0
    %769 = vmatpush1.msra.mxu0 0.0
    %770 = vmatprep.subr.mxu0 0.0
    %771 = vmatpush1.msra.mxu0 0.0
    %772 = vmatprep.subr.mxu0 0.0
    %773 = vmatpush1.msra.mxu0 %v672
    %774 = vmatprep.subr.mxu0 0.0
    %775 = vmatpush1.msra.mxu0 %v669
    %776 = vmatprep.subr.mxu0 0.0
    %777 = vmatpush2.msra.mxu0 0.0
    %778 = vmatprep.subr.mxu0 0.0
    %779 = vmatpush2.msra.mxu0 0.0
    %780 = vmatprep.subr.mxu0 0.0
    %781 = vmatpush2.msra.mxu0 0.0
    %782 = vmatprep.subr.mxu0 0.0
    %783 = vmatpush2.msra.mxu0 0.0
    %784 = vmatprep.subr.mxu0 0.0
    %785 = vmatpush2.msra.mxu0 0.0
    %786 = vmatprep.subr.mxu0 0.0
    %787 = vmatpush2.msra.mxu0 0.0
    %788 = vmatprep.subr.mxu0 0.0
    %789 = vmatpush2.msra.mxu0 0.0
    %790 = vmatprep.subr.mxu0 0.0
    %791 = vmatpush2.msra.mxu0 0.0
    %792 = vmatprep.subr.mxu0 0.0
    %793 = vmatpush2.msra.mxu0 0.0
    %794 = vmatprep.subr.mxu0 0.0
    %795 = vmatpush2.msra.mxu0 0.0
    %796 = vmatprep.subr.mxu0 0.0
    %797 = vmatpush2.msra.mxu0 0.0
    %798 = vmatprep.subr.mxu0 0.0
    %799 = vmatpush2.msra.mxu0 0.0
    %800 = vmatprep.subr.mxu0 0.0
    %801 = vmatpush2.msra.mxu0 0.0
    %802 = vmatprep.subr.mxu0 0.0
    %803 = vmatpush2.msra.mxu0 0.0
    %804 = vmatprep.subr.mxu0 0.0
    %805 = vmatpush2.msra.mxu0 0.0
    %806 = vmatprep.subr.mxu0 0.0
    %807 = vmatpush2.msra.mxu0 0.0
    %808 = vmatprep.mubr.f32.mxu0 0.0
    %809 = vmatmul.mubr.f32.gmra.mxu0 %v596
    %v810 = vpop.f32.mrf.mxu0
    %v811 = vadd.f32 0.0, %v810
    %v812 = vpop.f32.mrf.mxu0
    %813 = vdwg.mxu0
    %v814 = vmax.f32 %v741, %v811
    %v815 = vmax.f32 %v487, %v489
    %v816 = vmax.f32 %v488, %v490
    %v818 = vsel %vm521, %v816, 0
    %820 = vmatprep.subr.mxu0 0.0
    %821 = vmatpush1.msra.mxu0 0.0
    %822 = vmatprep.subr.mxu0 0.0
    %823 = vmatpush1.msra.mxu0 0.0
    %824 = vmatprep.subr.mxu0 0.0
    %825 = vmatpush1.msra.mxu0 0.0
    %826 = vmatprep.subr.mxu0 0.0
    %827 = vmatpush1.msra.mxu0 0.0
    %828 = vmatprep.subr.mxu0 0.0
    %829 = vmatpush1.msra.mxu0 0.0
    %830 = vmatprep.subr.mxu0 0.0
    %831 = vmatpush1.msra.mxu0 0.0
    %832 = vmatprep.subr.mxu0 0.0
    %833 = vmatpush1.msra.mxu0 0.0
    %834 = vmatprep.subr.mxu0 0.0
    %835 = vmatpush1.msra.mxu0 0.0
    %836 = vmatprep.subr.mxu0 0.0
    %837 = vmatpush1.msra.mxu0 0.0
    %838 = vmatprep.subr.mxu0 0.0
    %839 = vmatpush1.msra.mxu0 0.0
    %840 = vmatprep.subr.mxu0 0.0
    %841 = vmatpush1.msra.mxu0 0.0
    %842 = vmatprep.subr.mxu0 0.0
    %843 = vmatpush1.msra.mxu0 0.0
    %844 = vmatprep.subr.mxu0 0.0
    %845 = vmatpush1.msra.mxu0 0.0
    %846 = vmatprep.subr.mxu0 0.0
    %847 = vmatpush1.msra.mxu0 0.0
    %848 = vmatprep.subr.mxu0 0.0
    %849 = vmatpush1.msra.mxu0 %v818
    %850 = vmatprep.subr.mxu0 0.0
    %851 = vmatpush1.msra.mxu0 %v815
    %852 = vmatprep.subr.mxu0 0.0
    %853 = vmatpush2.msra.mxu0 0.0
    %854 = vmatprep.subr.mxu0 0.0
    %855 = vmatpush2.msra.mxu0 0.0
    %856 = vmatprep.subr.mxu0 0.0
    %857 = vmatpush2.msra.mxu0 0.0
    %858 = vmatprep.subr.mxu0 0.0
    %859 = vmatpush2.msra.mxu0 0.0
    %860 = vmatprep.subr.mxu0 0.0
    %861 = vmatpush2.msra.mxu0 0.0
    %862 = vmatprep.subr.mxu0 0.0
    %863 = vmatpush2.msra.mxu0 0.0
    %864 = vmatprep.subr.mxu0 0.0
    %865 = vmatpush2.msra.mxu0 0.0
    %866 = vmatprep.subr.mxu0 0.0
    %867 = vmatpush2.msra.mxu0 0.0
    %868 = vmatprep.subr.mxu0 0.0
    %869 = vmatpush2.msra.mxu0 0.0
    %870 = vmatprep.subr.mxu0 0.0
    %871 = vmatpush2.msra.mxu0 0.0
    %872 = vmatprep.subr.mxu0 0.0
    %873 = vmatpush2.msra.mxu0 0.0
    %874 = vmatprep.subr.mxu0 0.0
    %875 = vmatpush2.msra.mxu0 0.0
    %876 = vmatprep.subr.mxu0 0.0
    %877 = vmatpush2.msra.mxu0 0.0
    %878 = vmatprep.subr.mxu0 0.0
    %879 = vmatpush2.msra.mxu0 0.0
    %880 = vmatprep.subr.mxu0 0.0
    %881 = vmatpush2.msra.mxu0 0.0
    %882 = vmatprep.subr.mxu0 0.0
    %883 = vmatpush2.msra.mxu0 0.0
    %884 = vmatprep.mubr.f32.mxu0 0.0
    %885 = vmatmul.mubr.f32.gmra.mxu0 %v519
    %v886 = vpop.f32.mrf.mxu0
    %v887 = vadd.f32 0.0, %v886
    %v888 = vpop.f32.mrf.mxu0
    %889 = vdwg.mxu0
    %890 = vmatprep.subr.mxu0 0.0
    %891 = vmatpush1.msra.mxu0 0.0
    %892 = vmatprep.subr.mxu0 0.0
    %893 = vmatpush1.msra.mxu0 0.0
    %894 = vmatprep.subr.mxu0 0.0
    %895 = vmatpush1.msra.mxu0 0.0
    %896 = vmatprep.subr.mxu0 0.0
    %897 = vmatpush1.msra.mxu0 0.0
    %898 = vmatprep.subr.mxu0 0.0
    %899 = vmatpush1.msra.mxu0 0.0
    %900 = vmatprep.subr.mxu0 0.0
    %901 = vmatpush1.msra.mxu0 0.0
    %902 = vmatprep.subr.mxu0 0.0
    %903 = vmatpush1.msra.mxu0 0.0
    %904 = vmatprep.subr.mxu0 0.0
    %905 = vmatpush1.msra.mxu0 0.0
    %906 = vmatprep.subr.mxu0 0.0
    %907 = vmatpush1.msra.mxu0 0.0
    %908 = vmatprep.subr.mxu0 0.0
    %909 = vmatpush1.msra.mxu0 0.0
    %910 = vmatprep.subr.mxu0 0.0
    %911 = vmatpush1.msra.mxu0 0.0
    %912 = vmatprep.subr.mxu0 0.0
    %913 = vmatpush1.msra.mxu0 0.0
    %914 = vmatprep.subr.mxu0 0.0
    %915 = vmatpush1.msra.mxu0 0.0
    %916 = vmatprep.subr.mxu0 0.0
    %917 = vmatpush1.msra.mxu0 0.0
    %918 = vmatprep.subr.mxu0 0.0
    %919 = vmatpush1.msra.mxu0 %v818
    %920 = vmatprep.subr.mxu0 0.0
    %921 = vmatpush1.msra.mxu0 %v815
    %922 = vmatprep.subr.mxu0 0.0
    %923 = vmatpush2.msra.mxu0 0.0
    %924 = vmatprep.subr.mxu0 0.0
    %925 = vmatpush2.msra.mxu0 0.0
    %926 = vmatprep.subr.mxu0 0.0
    %927 = vmatpush2.msra.mxu0 0.0
    %928 = vmatprep.subr.mxu0 0.0
    %929 = vmatpush2.msra.mxu0 0.0
    %930 = vmatprep.subr.mxu0 0.0
    %931 = vmatpush2.msra.mxu0 0.0
    %932 = vmatprep.subr.mxu0 0.0
    %933 = vmatpush2.msra.mxu0 0.0
    %934 = vmatprep.subr.mxu0 0.0
    %935 = vmatpush2.msra.mxu0 0.0
    %936 = vmatprep.subr.mxu0 0.0
    %937 = vmatpush2.msra.mxu0 0.0
    %938 = vmatprep.subr.mxu0 0.0
    %939 = vmatpush2.msra.mxu0 0.0
    %940 = vmatprep.subr.mxu0 0.0
    %941 = vmatpush2.msra.mxu0 0.0
    %942 = vmatprep.subr.mxu0 0.0
    %943 = vmatpush2.msra.mxu0 0.0
    %944 = vmatprep.subr.mxu0 0.0
    %945 = vmatpush2.msra.mxu0 0.0
    %946 = vmatprep.subr.mxu0 0.0
    %947 = vmatpush2.msra.mxu0 0.0
    %948 = vmatprep.subr.mxu0 0.0
    %949 = vmatpush2.msra.mxu0 0.0
    %950 = vmatprep.subr.mxu0 0.0
    %951 = vmatpush2.msra.mxu0 0.0
    %952 = vmatprep.subr.mxu0 0.0
    %953 = vmatpush2.msra.mxu0 0.0
    %954 = vmatprep.mubr.f32.mxu0 0.0
    %955 = vmatmul.mubr.f32.gmra.mxu0 %v596
    %v956 = vpop.f32.mrf.mxu0
    %v957 = vadd.f32 0.0, %v956
    %v958 = vpop.f32.mrf.mxu0
    %959 = vdwg.mxu0
    %v960 = vmax.f32 %v887, %v957
    %v961 = vmax.f32 %v491, %v493
    %v962 = vmax.f32 %v492, %v494
    %v964 = vsel %vm521, %v962, 0
    %966 = vmatprep.subr.mxu0 0.0
    %967 = vmatpush1.msra.mxu0 0.0
    %968 = vmatprep.subr.mxu0 0.0
    %969 = vmatpush1.msra.mxu0 0.0
    %970 = vmatprep.subr.mxu0 0.0
    %971 = vmatpush1.msra.mxu0 0.0
    %972 = vmatprep.subr.mxu0 0.0
    %973 = vmatpush1.msra.mxu0 0.0
    %974 = vmatprep.subr.mxu0 0.0
    %975 = vmatpush1.msra.mxu0 0.0
    %976 = vmatprep.subr.mxu0 0.0
    %977 = vmatpush1.msra.mxu0 0.0
    %978 = vmatprep.subr.mxu0 0.0
    %979 = vmatpush1.msra.mxu0 0.0
    %980 = vmatprep.subr.mxu0 0.0
    %981 = vmatpush1.msra.mxu0 0.0
    %982 = vmatprep.subr.mxu0 0.0
    %983 = vmatpush1.msra.mxu0 0.0
    %984 = vmatprep.subr.mxu0 0.0
    %985 = vmatpush1.msra.mxu0 0.0
    %986 = vmatprep.subr.mxu0 0.0
    %987 = vmatpush1.msra.mxu0 0.0
    %988 = vmatprep.subr.mxu0 0.0
    %989 = vmatpush1.msra.mxu0 0.0
    %990 = vmatprep.subr.mxu0 0.0
    %991 = vmatpush1.msra.mxu0 0.0
    %992 = vmatprep.subr.mxu0 0.0
    %993 = vmatpush1.msra.mxu0 0.0
    %994 = vmatprep.subr.mxu0 0.0
    %995 = vmatpush1.msra.mxu0 %v964
    %996 = vmatprep.subr.mxu0 0.0
    %997 = vmatpush1.msra.mxu0 %v961
    %998 = vmatprep.subr.mxu0 0.0
    %999 = vmatpush2.msra.mxu0 0.0
    %1000 = vmatprep.subr.mxu0 0.0
    %1001 = vmatpush2.msra.mxu0 0.0
    %1002 = vmatprep.subr.mxu0 0.0
    %1003 = vmatpush2.msra.mxu0 0.0
    %1004 = vmatprep.subr.mxu0 0.0
    %1005 = vmatpush2.msra.mxu0 0.0
    %1006 = vmatprep.subr.mxu0 0.0
    %1007 = vmatpush2.msra.mxu0 0.0
    %1008 = vmatprep.subr.mxu0 0.0
    %1009 = vmatpush2.msra.mxu0 0.0
    %1010 = vmatprep.subr.mxu0 0.0
    %1011 = vmatpush2.msra.mxu0 0.0
    %1012 = vmatprep.subr.mxu0 0.0
    %1013 = vmatpush2.msra.mxu0 0.0
    %1014 = vmatprep.subr.mxu0 0.0
    %1015 = vmatpush2.msra.mxu0 0.0
    %1016 = vmatprep.subr.mxu0 0.0
    %1017 = vmatpush2.msra.mxu0 0.0
    %1018 = vmatprep.subr.mxu0 0.0
    %1019 = vmatpush2.msra.mxu0 0.0
    %1020 = vmatprep.subr.mxu0 0.0
    %1021 = vmatpush2.msra.mxu0 0.0
    %1022 = vmatprep.subr.mxu0 0.0
    %1023 = vmatpush2.msra.mxu0 0.0
    %1024 = vmatprep.subr.mxu0 0.0
    %1025 = vmatpush2.msra.mxu0 0.0
    %1026 = vmatprep.subr.mxu0 0.0
    %1027 = vmatpush2.msra.mxu0 0.0
    %1028 = vmatprep.subr.mxu0 0.0
    %1029 = vmatpush2.msra.mxu0 0.0
    %1030 = vmatprep.mubr.f32.mxu0 0.0
    %1031 = vmatmul.mubr.f32.gmra.mxu0 %v519
    %v1032 = vpop.f32.mrf.mxu0
    %v1033 = vadd.f32 0.0, %v1032
    %v1034 = vpop.f32.mrf.mxu0
    %1035 = vdwg.mxu0
    %1036 = vmatprep.subr.mxu0 0.0
    %1037 = vmatpush1.msra.mxu0 0.0
    %1038 = vmatprep.subr.mxu0 0.0
    %1039 = vmatpush1.msra.mxu0 0.0
    %1040 = vmatprep.subr.mxu0 0.0
    %1041 = vmatpush1.msra.mxu0 0.0
    %1042 = vmatprep.subr.mxu0 0.0
    %1043 = vmatpush1.msra.mxu0 0.0
    %1044 = vmatprep.subr.mxu0 0.0
    %1045 = vmatpush1.msra.mxu0 0.0
    %1046 = vmatprep.subr.mxu0 0.0
    %1047 = vmatpush1.msra.mxu0 0.0
    %1048 = vmatprep.subr.mxu0 0.0
    %1049 = vmatpush1.msra.mxu0 0.0
    %1050 = vmatprep.subr.mxu0 0.0
    %1051 = vmatpush1.msra.mxu0 0.0
    %1052 = vmatprep.subr.mxu0 0.0
    %1053 = vmatpush1.msra.mxu0 0.0
    %1054 = vmatprep.subr.mxu0 0.0
    %1055 = vmatpush1.msra.mxu0 0.0
    %1056 = vmatprep.subr.mxu0 0.0
    %1057 = vmatpush1.msra.mxu0 0.0
    %1058 = vmatprep.subr.mxu0 0.0
    %1059 = vmatpush1.msra.mxu0 0.0
    %1060 = vmatprep.subr.mxu0 0.0
    %1061 = vmatpush1.msra.mxu0 0.0
    %1062 = vmatprep.subr.mxu0 0.0
    %1063 = vmatpush1.msra.mxu0 0.0
    %1064 = vmatprep.subr.mxu0 0.0
    %1065 = vmatpush1.msra.mxu0 %v964
    %1066 = vmatprep.subr.mxu0 0.0
    %1067 = vmatpush1.msra.mxu0 %v961
    %1068 = vmatprep.subr.mxu0 0.0
    %1069 = vmatpush2.msra.mxu0 0.0
    %1070 = vmatprep.subr.mxu0 0.0
    %1071 = vmatpush2.msra.mxu0 0.0
    %1072 = vmatprep.subr.mxu0 0.0
    %1073 = vmatpush2.msra.mxu0 0.0
    %1074 = vmatprep.subr.mxu0 0.0
    %1075 = vmatpush2.msra.mxu0 0.0
    %1076 = vmatprep.subr.mxu0 0.0
    %1077 = vmatpush2.msra.mxu0 0.0
    %1078 = vmatprep.subr.mxu0 0.0
    %1079 = vmatpush2.msra.mxu0 0.0
    %1080 = vmatprep.subr.mxu0 0.0
    %1081 = vmatpush2.msra.mxu0 0.0
    %1082 = vmatprep.subr.mxu0 0.0
    %1083 = vmatpush2.msra.mxu0 0.0
    %1084 = vmatprep.subr.mxu0 0.0
    %1085 = vmatpush2.msra.mxu0 0.0
    %1086 = vmatprep.subr.mxu0 0.0
    %1087 = vmatpush2.msra.mxu0 0.0
    %1088 = vmatprep.subr.mxu0 0.0
    %1089 = vmatpush2.msra.mxu0 0.0
    %1090 = vmatprep.subr.mxu0 0.0
    %1091 = vmatpush2.msra.mxu0 0.0
    %1092 = vmatprep.subr.mxu0 0.0
    %1093 = vmatpush2.msra.mxu0 0.0
    %1094 = vmatprep.subr.mxu0 0.0
    %1095 = vmatpush2.msra.mxu0 0.0
    %1096 = vmatprep.subr.mxu0 0.0
    %1097 = vmatpush2.msra.mxu0 0.0
    %1098 = vmatprep.subr.mxu0 0.0
    %1099 = vmatpush2.msra.mxu0 0.0
    %1100 = vmatprep.mubr.f32.mxu0 0.0
    %1101 = vmatmul.mubr.f32.gmra.mxu0 %v596
    %v1102 = vpop.f32.mrf.mxu0
    %v1103 = vadd.f32 0.0, %v1102
    %v1104 = vpop.f32.mrf.mxu0
    %1105 = vdwg.mxu0
    %v1106 = vmax.f32 %v1033, %v1103
    %v1107 = vmax.f32 %v495, %v497
    %v1108 = vmax.f32 %v496, %v498
    %v1110 = vsel %vm521, %v1108, 0
    %1112 = vmatprep.subr.mxu0 0.0
    %1113 = vmatpush1.msra.mxu0 0.0
    %1114 = vmatprep.subr.mxu0 0.0
    %1115 = vmatpush1.msra.mxu0 0.0
    %1116 = vmatprep.subr.mxu0 0.0
    %1117 = vmatpush1.msra.mxu0 0.0
    %1118 = vmatprep.subr.mxu0 0.0
    %1119 = vmatpush1.msra.mxu0 0.0
    %1120 = vmatprep.subr.mxu0 0.0
    %1121 = vmatpush1.msra.mxu0 0.0
    %1122 = vmatprep.subr.mxu0 0.0
    %1123 = vmatpush1.msra.mxu0 0.0
    %1124 = vmatprep.subr.mxu0 0.0
    %1125 = vmatpush1.msra.mxu0 0.0
    %1126 = vmatprep.subr.mxu0 0.0
    %1127 = vmatpush1.msra.mxu0 0.0
    %1128 = vmatprep.subr.mxu0 0.0
    %1129 = vmatpush1.msra.mxu0 0.0
    %1130 = vmatprep.subr.mxu0 0.0
    %1131 = vmatpush1.msra.mxu0 0.0
    %1132 = vmatprep.subr.mxu0 0.0
    %1133 = vmatpush1.msra.mxu0 0.0
    %1134 = vmatprep.subr.mxu0 0.0
    %1135 = vmatpush1.msra.mxu0 0.0
    %1136 = vmatprep.subr.mxu0 0.0
    %1137 = vmatpush1.msra.mxu0 0.0
    %1138 = vmatprep.subr.mxu0 0.0
    %1139 = vmatpush1.msra.mxu0 0.0
    %1140 = vmatprep.subr.mxu0 0.0
    %1141 = vmatpush1.msra.mxu0 %v1110
    %1142 = vmatprep.subr.mxu0 0.0
    %1143 = vmatpush1.msra.mxu0 %v1107
    %1144 = vmatprep.subr.mxu0 0.0
    %1145 = vmatpush2.msra.mxu0 0.0
    %1146 = vmatprep.subr.mxu0 0.0
    %1147 = vmatpush2.msra.mxu0 0.0
    %1148 = vmatprep.subr.mxu0 0.0
    %1149 = vmatpush2.msra.mxu0 0.0
    %1150 = vmatprep.subr.mxu0 0.0
    %1151 = vmatpush2.msra.mxu0 0.0
    %1152 = vmatprep.subr.mxu0 0.0
    %1153 = vmatpush2.msra.mxu0 0.0
    %1154 = vmatprep.subr.mxu0 0.0
    %1155 = vmatpush2.msra.mxu0 0.0
    %1156 = vmatprep.subr.mxu0 0.0
    %1157 = vmatpush2.msra.mxu0 0.0
    %1158 = vmatprep.subr.mxu0 0.0
    %1159 = vmatpush2.msra.mxu0 0.0
    %1160 = vmatprep.subr.mxu0 0.0
    %1161 = vmatpush2.msra.mxu0 0.0
    %1162 = vmatprep.subr.mxu0 0.0
    %1163 = vmatpush2.msra.mxu0 0.0
    %1164 = vmatprep.subr.mxu0 0.0
    %1165 = vmatpush2.msra.mxu0 0.0
    %1166 = vmatprep.subr.mxu0 0.0
    %1167 = vmatpush2.msra.mxu0 0.0
    %1168 = vmatprep.subr.mxu0 0.0
    %1169 = vmatpush2.msra.mxu0 0.0
    %1170 = vmatprep.subr.mxu0 0.0
    %1171 = vmatpush2.msra.mxu0 0.0
    %1172 = vmatprep.subr.mxu0 0.0
    %1173 = vmatpush2.msra.mxu0 0.0
    %1174 = vmatprep.subr.mxu0 0.0
    %1175 = vmatpush2.msra.mxu0 0.0
    %1176 = vmatprep.mubr.f32.mxu0 0.0
    %1177 = vmatmul.mubr.f32.gmra.mxu0 %v519
    %v1178 = vpop.f32.mrf.mxu0
    %v1179 = vadd.f32 0.0, %v1178
    %v1180 = vpop.f32.mrf.mxu0
    %1181 = vdwg.mxu0
    %1182 = vmatprep.subr.mxu0 0.0
    %1183 = vmatpush1.msra.mxu0 0.0
    %1184 = vmatprep.subr.mxu0 0.0
    %1185 = vmatpush1.msra.mxu0 0.0
    %1186 = vmatprep.subr.mxu0 0.0
    %1187 = vmatpush1.msra.mxu0 0.0
    %1188 = vmatprep.subr.mxu0 0.0
    %1189 = vmatpush1.msra.mxu0 0.0
    %1190 = vmatprep.subr.mxu0 0.0
    %1191 = vmatpush1.msra.mxu0 0.0
    %1192 = vmatprep.subr.mxu0 0.0
    %1193 = vmatpush1.msra.mxu0 0.0
    %1194 = vmatprep.subr.mxu0 0.0
    %1195 = vmatpush1.msra.mxu0 0.0
    %1196 = vmatprep.subr.mxu0 0.0
    %1197 = vmatpush1.msra.mxu0 0.0
    %1198 = vmatprep.subr.mxu0 0.0
    %1199 = vmatpush1.msra.mxu0 0.0
    %1200 = vmatprep.subr.mxu0 0.0
    %1201 = vmatpush1.msra.mxu0 0.0
    %1202 = vmatprep.subr.mxu0 0.0
    %1203 = vmatpush1.msra.mxu0 0.0
    %1204 = vmatprep.subr.mxu0 0.0
    %1205 = vmatpush1.msra.mxu0 0.0
    %1206 = vmatprep.subr.mxu0 0.0
    %1207 = vmatpush1.msra.mxu0 0.0
    %1208 = vmatprep.subr.mxu0 0.0
    %1209 = vmatpush1.msra.mxu0 0.0
    %1210 = vmatprep.subr.mxu0 0.0
    %1211 = vmatpush1.msra.mxu0 %v1110
    %1212 = vmatprep.subr.mxu0 0.0
    %1213 = vmatpush1.msra.mxu0 %v1107
    %1214 = vmatprep.subr.mxu0 0.0
    %1215 = vmatpush2.msra.mxu0 0.0
    %1216 = vmatprep.subr.mxu0 0.0
    %1217 = vmatpush2.msra.mxu0 0.0
    %1218 = vmatprep.subr.mxu0 0.0
    %1219 = vmatpush2.msra.mxu0 0.0
    %1220 = vmatprep.subr.mxu0 0.0
    %1221 = vmatpush2.msra.mxu0 0.0
    %1222 = vmatprep.subr.mxu0 0.0
    %1223 = vmatpush2.msra.mxu0 0.0
    %1224 = vmatprep.subr.mxu0 0.0
    %1225 = vmatpush2.msra.mxu0 0.0
    %1226 = vmatprep.subr.mxu0 0.0
    %1227 = vmatpush2.msra.mxu0 0.0
    %1228 = vmatprep.subr.mxu0 0.0
    %1229 = vmatpush2.msra.mxu0 0.0
    %1230 = vmatprep.subr.mxu0 0.0
    %1231 = vmatpush2.msra.mxu0 0.0
    %1232 = vmatprep.subr.mxu0 0.0
    %1233 = vmatpush2.msra.mxu0 0.0
    %1234 = vmatprep.subr.mxu0 0.0
    %1235 = vmatpush2.msra.mxu0 0.0
    %1236 = vmatprep.subr.mxu0 0.0
    %1237 = vmatpush2.msra.mxu0 0.0
    %1238 = vmatprep.subr.mxu0 0.0
    %1239 = vmatpush2.msra.mxu0 0.0
    %1240 = vmatprep.subr.mxu0 0.0
    %1241 = vmatpush2.msra.mxu0 0.0
    %1242 = vmatprep.subr.mxu0 0.0
    %1243 = vmatpush2.msra.mxu0 0.0
    %1244 = vmatprep.subr.mxu0 0.0
    %1245 = vmatpush2.msra.mxu0 0.0
    %1246 = vmatprep.mubr.f32.mxu0 0.0
    %1247 = vmatmul.mubr.f32.gmra.mxu0 %v596
    %v1248 = vpop.f32.mrf.mxu0
    %v1249 = vadd.f32 0.0, %v1248
    %v1250 = vpop.f32.mrf.mxu0
    %1251 = vdwg.mxu0
    %v1252 = vmax.f32 %v1179, %v1249
    %v1253 = vmax.f32 %v499, %v501
    %v1254 = vmax.f32 %v500, %v502
    %v1256 = vsel %vm521, %v1254, 0
    %1258 = vmatprep.subr.mxu0 0.0
    %1259 = vmatpush1.msra.mxu0 0.0
    %1260 = vmatprep.subr.mxu0 0.0
    %1261 = vmatpush1.msra.mxu0 0.0
    %1262 = vmatprep.subr.mxu0 0.0
    %1263 = vmatpush1.msra.mxu0 0.0
    %1264 = vmatprep.subr.mxu0 0.0
    %1265 = vmatpush1.msra.mxu0 0.0
    %1266 = vmatprep.subr.mxu0 0.0
    %1267 = vmatpush1.msra.mxu0 0.0
    %1268 = vmatprep.subr.mxu0 0.0
    %1269 = vmatpush1.msra.mxu0 0.0
    %1270 = vmatprep.subr.mxu0 0.0
    %1271 = vmatpush1.msra.mxu0 0.0
    %1272 = vmatprep.subr.mxu0 0.0
    %1273 = vmatpush1.msra.mxu0 0.0
    %1274 = vmatprep.subr.mxu0 0.0
    %1275 = vmatpush1.msra.mxu0 0.0
    %1276 = vmatprep.subr.mxu0 0.0
    %1277 = vmatpush1.msra.mxu0 0.0
    %1278 = vmatprep.subr.mxu0 0.0
    %1279 = vmatpush1.msra.mxu0 0.0
    %1280 = vmatprep.subr.mxu0 0.0
    %1281 = vmatpush1.msra.mxu0 0.0
    %1282 = vmatprep.subr.mxu0 0.0
    %1283 = vmatpush1.msra.mxu0 0.0
    %1284 = vmatprep.subr.mxu0 0.0
    %1285 = vmatpush1.msra.mxu0 0.0
    %1286 = vmatprep.subr.mxu0 0.0
    %1287 = vmatpush1.msra.mxu0 %v1256
    %1288 = vmatprep.subr.mxu0 0.0
    %1289 = vmatpush1.msra.mxu0 %v1253
    %1290 = vmatprep.subr.mxu0 0.0
    %1291 = vmatpush2.msra.mxu0 0.0
    %1292 = vmatprep.subr.mxu0 0.0
    %1293 = vmatpush2.msra.mxu0 0.0
    %1294 = vmatprep.subr.mxu0 0.0
    %1295 = vmatpush2.msra.mxu0 0.0
    %1296 = vmatprep.subr.mxu0 0.0
    %1297 = vmatpush2.msra.mxu0 0.0
    %1298 = vmatprep.subr.mxu0 0.0
    %1299 = vmatpush2.msra.mxu0 0.0
    %1300 = vmatprep.subr.mxu0 0.0
    %1301 = vmatpush2.msra.mxu0 0.0
    %1302 = vmatprep.subr.mxu0 0.0
    %1303 = vmatpush2.msra.mxu0 0.0
    %1304 = vmatprep.subr.mxu0 0.0
    %1305 = vmatpush2.msra.mxu0 0.0
    %1306 = vmatprep.subr.mxu0 0.0
    %1307 = vmatpush2.msra.mxu0 0.0
    %1308 = vmatprep.subr.mxu0 0.0
    %1309 = vmatpush2.msra.mxu0 0.0
    %1310 = vmatprep.subr.mxu0 0.0
    %1311 = vmatpush2.msra.mxu0 0.0
    %1312 = vmatprep.subr.mxu0 0.0
    %1313 = vmatpush2.msra.mxu0 0.0
    %1314 = vmatprep.subr.mxu0 0.0
    %1315 = vmatpush2.msra.mxu0 0.0
    %1316 = vmatprep.subr.mxu0 0.0
    %1317 = vmatpush2.msra.mxu0 0.0
    %1318 = vmatprep.subr.mxu0 0.0
    %1319 = vmatpush2.msra.mxu0 0.0
    %1320 = vmatprep.subr.mxu0 0.0
    %1321 = vmatpush2.msra.mxu0 0.0
    %1322 = vmatprep.mubr.f32.mxu0 0.0
    %1323 = vmatmul.mubr.f32.gmra.mxu0 %v519
    %v1324 = vpop.f32.mrf.mxu0
    %v1325 = vadd.f32 0.0, %v1324
    %v1326 = vpop.f32.mrf.mxu0
    %1327 = vdwg.mxu0
    %1328 = vmatprep.subr.mxu0 0.0
    %1329 = vmatpush1.msra.mxu0 0.0
    %1330 = vmatprep.subr.mxu0 0.0
    %1331 = vmatpush1.msra.mxu0 0.0
    %1332 = vmatprep.subr.mxu0 0.0
    %1333 = vmatpush1.msra.mxu0 0.0
    %1334 = vmatprep.subr.mxu0 0.0
    %1335 = vmatpush1.msra.mxu0 0.0
    %1336 = vmatprep.subr.mxu0 0.0
    %1337 = vmatpush1.msra.mxu0 0.0
    %1338 = vmatprep.subr.mxu0 0.0
    %1339 = vmatpush1.msra.mxu0 0.0
    %1340 = vmatprep.subr.mxu0 0.0
    %1341 = vmatpush1.msra.mxu0 0.0
    %1342 = vmatprep.subr.mxu0 0.0
    %1343 = vmatpush1.msra.mxu0 0.0
    %1344 = vmatprep.subr.mxu0 0.0
    %1345 = vmatpush1.msra.mxu0 0.0
    %1346 = vmatprep.subr.mxu0 0.0
    %1347 = vmatpush1.msra.mxu0 0.0
    %1348 = vmatprep.subr.mxu0 0.0
    %1349 = vmatpush1.msra.mxu0 0.0
    %1350 = vmatprep.subr.mxu0 0.0
    %1351 = vmatpush1.msra.mxu0 0.0
    %1352 = vmatprep.subr.mxu0 0.0
    %1353 = vmatpush1.msra.mxu0 0.0
    %1354 = vmatprep.subr.mxu0 0.0
    %1355 = vmatpush1.msra.mxu0 0.0
    %1356 = vmatprep.subr.mxu0 0.0
    %1357 = vmatpush1.msra.mxu0 %v1256
    %1358 = vmatprep.subr.mxu0 0.0
    %1359 = vmatpush1.msra.mxu0 %v1253
    %1360 = vmatprep.subr.mxu0 0.0
    %1361 = vmatpush2.msra.mxu0 0.0
    %1362 = vmatprep.subr.mxu0 0.0
    %1363 = vmatpush2.msra.mxu0 0.0
    %1364 = vmatprep.subr.mxu0 0.0
    %1365 = vmatpush2.msra.mxu0 0.0
    %1366 = vmatprep.subr.mxu0 0.0
    %1367 = vmatpush2.msra.mxu0 0.0
    %1368 = vmatprep.subr.mxu0 0.0
    %1369 = vmatpush2.msra.mxu0 0.0
    %1370 = vmatprep.subr.mxu0 0.0
    %1371 = vmatpush2.msra.mxu0 0.0
    %1372 = vmatprep.subr.mxu0 0.0
    %1373 = vmatpush2.msra.mxu0 0.0
    %1374 = vmatprep.subr.mxu0 0.0
    %1375 = vmatpush2.msra.mxu0 0.0
    %1376 = vmatprep.subr.mxu0 0.0
    %1377 = vmatpush2.msra.mxu0 0.0
    %1378 = vmatprep.subr.mxu0 0.0
    %1379 = vmatpush2.msra.mxu0 0.0
    %1380 = vmatprep.subr.mxu0 0.0
    %1381 = vmatpush2.msra.mxu0 0.0
    %1382 = vmatprep.subr.mxu0 0.0
    %1383 = vmatpush2.msra.mxu0 0.0
    %1384 = vmatprep.subr.mxu0 0.0
    %1385 = vmatpush2.msra.mxu0 0.0
    %1386 = vmatprep.subr.mxu0 0.0
    %1387 = vmatpush2.msra.mxu0 0.0
    %1388 = vmatprep.subr.mxu0 0.0
    %1389 = vmatpush2.msra.mxu0 0.0
    %1390 = vmatprep.subr.mxu0 0.0
    %1391 = vmatpush2.msra.mxu0 0.0
    %1392 = vmatprep.mubr.f32.mxu0 0.0
    %1393 = vmatmul.mubr.f32.gmra.mxu0 %v596
    %v1394 = vpop.f32.mrf.mxu0
    %v1395 = vadd.f32 0.0, %v1394
    %v1396 = vpop.f32.mrf.mxu0
    %1397 = vdwg.mxu0
    %v1398 = vmax.f32 %v1325, %v1395
    %v1400 = vrot.slane %v814, 2
    %v1403 = vrot.slane %v960, 4
    %v1406 = vrot.slane %v1106, 6
    %v1409 = vrot.slane %v1398, 2
    %vm1411 = vcmask 1045504
    %v1412 = vsel %vm1411, %v668, %v1400
    %v1413 = vsel %vm521, %v1400, %v1403
    %vm1414 = vcmask 1041408
    %v1415 = vsel %vm1414, %v1403, %v1406
    %v1416 = vsel %vm1411, %v1252, %v1409
    %s1417 = sld [smem:[#allocation2]]
    %v1418 = vstv %s1417
    %vm1419 = vcmp.lt.s32.totalorder %v504, %v1418
    %v1420 = vsel %vm1419, 1, 0
    %vm1421 = vcmp.eq.s32.totalorder %v1420, 1
    %v1422 = vsel %vm1421, %v1412, 0.0
    %v1423 = vsel %vm1421, %v1413, 0.0
    %v1424 = vsel %vm1421, %v1415, 0.0
    %v1425 = vsel %vm1421, %v1416, 0.0
    %v1426 = vsel %vm1421, %v1409, 0.0
    %s1427 = scvt.s32.f32 %s1417
    %s1428 = smul.f32 %s1427, 36.0
    %1429 = vadd.xlane.f32.xlu0 %v1422
    %v1430 = vpop.xlane.xlu0 %1429
    %1431 = vadd.xlane.f32.xlu0 %v1423
    %v1432 = vpop.xlane.xlu0 %1431
    %1433 = vadd.xlane.f32.xlu0 %v1424
    %v1434 = vpop.xlane.xlu0 %1433
    %1435 = vadd.xlane.f32.xlu0 %v1425
    %v1436 = vpop.xlane.xlu0 %1435
    %v1437 = vsel %vm521, %v1426, 0.0
    %1438 = vadd.xlane.f32.xlu0 %v1437
    %v1439 = vpop.xlane.xlu0 %1438
    %v1440 = vadd.f32 %v1430, %v1432
    %v1441 = vadd.f32 %v1440, %v1434
    %v1442 = vadd.f32 %v1441, %v1436
    %v1443 = vsel %vm521, %v1439, 0.0
    %v1444 = vadd.f32 %v1442, %v1443
    %v1445 = vrot.slane %v1444, 4
    %v1446 = vadd.f32 %v1444, %v1445
    %v1447 = vrot.slane %v1446, 2
    %v1448 = vadd.f32 %v1446, %v1447
    %v1449 = vrot.slane %v1448, 1
    %v1450 = vadd.f32 %v1448, %v1449
    %v1451 = vmul.f32 %v1422, %v1422
    %v1452 = vmul.f32 %v1423, %v1423
    %v1453 = vmul.f32 %v1424, %v1424
    %v1454 = vmul.f32 %v1425, %v1425
    %v1455 = vmul.f32 %v1426, %v1426
    %1456 = vadd.xlane.f32.xlu0 %v1451
    %v1457 = vpop.xlane.xlu0 %1456
    %1458 = vadd.xlane.f32.xlu0 %v1452
    %v1459 = vpop.xlane.xlu0 %1458
    %1460 = vadd.xlane.f32.xlu0 %v1453
    %v1461 = vpop.xlane.xlu0 %1460
    %1462 = vadd.xlane.f32.xlu0 %v1454
    %v1463 = vpop.xlane.xlu0 %1462
    %v1464 = vsel %vm521, %v1455, 0.0
    %1465 = vadd.xlane.f32.xlu0 %v1464
    %v1466 = vpop.xlane.xlu0 %1465
    %v1467 = vadd.f32 %v1457, %v1459
    %v1468 = vadd.f32 %v1467, %v1461
    %v1469 = vadd.f32 %v1468, %v1463
    %v1470 = vsel %vm521, %v1466, 0.0
    %v1471 = vadd.f32 %v1469, %v1470
    %v1472 = vrot.slane %v1471, 4
    %v1473 = vadd.f32 %v1471, %v1472
    %v1474 = vrot.slane %v1473, 2
    %v1475 = vadd.f32 %v1473, %v1474
    %v1476 = vrot.slane %v1475, 1
    %v1477 = vadd.f32 %v1475, %v1476
    %v1478 = vstv %s1428
    %v1479 = vrcp.pop %v1478
    %v1480 = vmul.f32 %v1450, %v1479
    %v1481 = vmul.f32 %v1477, %v1479
    %v1482 = vmul.f32 %v1480, %v1480
    %v1483 = vsub.f32 %v1481, %v1482
    %s1484 = sld [smem:[#allocation6]]
    %v1485 = vadd.f32 %v1483, 1e-05
    %v1486 = vrsqrt.pop %v1485
    %v1487 = vstv %s1484
    %v1488 = vmul.f32 %v1487, %v1486
    %s1489 = sld [smem:[#allocation6 + $0x1]]
    %v1490 = vmul.f32 %v1480, %v1488
    %v1491 = vstv %s1489
    %v1492 = vsub.f32 %v1491, %v1490
    %v1493 = vmul.f32 %v1412, %v1488
    %v1494 = vmul.f32 %v1413, %v1488
    %v1495 = vmul.f32 %v1415, %v1488
    %v1496 = vmul.f32 %v1416, %v1488
    %v1497 = vmul.f32 %v1409, %v1488
    %v1498 = vadd.f32 %v1493, %v1492
    %v1499 = vadd.f32 %v1494, %v1492
    %v1500 = vadd.f32 %v1495, %v1492
    %v1501 = vadd.f32 %v1496, %v1492
    %v1502 = vadd.f32 %v1497, %v1492
    %v1503 = vld [vmem:[%s4] sm:$0xff]
    %v1504 = vld [vmem:[%s4 + $0x8] sm:$0xff]
    %v1505 = vld [vmem:[%s4 + $0x10] sm:$0xff]
    %v1506 = vld [vmem:[%s4 + $0x18] sm:$0xff]
    %v1507 = vld [vmem:[%s4 + $0x20] sm:$0xff]
    %v1508 = vld [vmem:[%s4 + $0x28] sm:$0xff]
    %v1509 = vld [vmem:[%s4 + $0x30] sm:$0xff]
    %v1510 = vld [vmem:[%s4 + $0x38] sm:$0xff]
    %v1511 = vld [vmem:[%s4 + $0x40] sm:$0xff]
    %v1512 = vld [vmem:[%s4 + $0x48] sm:$0xff]
    %v1513 = vld [vmem:[%s4 + $0x50] sm:$0xff]
    %v1514 = vld [vmem:[%s4 + $0x58] sm:$0xff]
    %v1515 = vld [vmem:[%s4 + $0x60] sm:$0xf]
    %v1516 = vld [vmem:[%s5] sm:$0xff]
    %v1517 = vld [vmem:[%s5 + $0x8] sm:$0xff]
    %v1518 = vld [vmem:[%s5 + $0x10] sm:$0xff]
    %v1519 = vld [vmem:[%s5 + $0x18] sm:$0xff]
    %v1520 = vld [vmem:[%s5 + $0x20] sm:$0xff]
    %v1521 = vld [vmem:[%s5 + $0x28] sm:$0xff]
    %v1522 = vld [vmem:[%s5 + $0x30] sm:$0xff]
    %v1523 = vld [vmem:[%s5 + $0x38] sm:$0xff]
    %v1524 = vld [vmem:[%s5 + $0x40] sm:$0xff]
    %v1525 = vld [vmem:[%s5 + $0x48] sm:$0xff]
    %v1526 = vld [vmem:[%s5 + $0x50] sm:$0xff]
    %v1527 = vld [vmem:[%s5 + $0x58] sm:$0xff]
    %v1528 = vld [vmem:[%s5 + $0x60] sm:$0xf]
    %1530 = vset.pattern.permute.xlu0 0
    %1531 = vperm.xlu0 %1530, %v1516
    %v1532 = vpop.permute.xlu0 %1531
    %1535 = vset.pattern.permute.xlu0 0
    %1536 = vperm.xlu0 %1535, %v1517
    %v1537 = vpop.permute.xlu0 %1536
    %1540 = vset.pattern.permute.xlu0 0
    %1541 = vperm.xlu0 %1540, %v1518
    %v1542 = vpop.permute.xlu0 %1541
    %1545 = vset.pattern.permute.xlu0 0
    %1546 = vperm.xlu0 %1545, %v1519
    %v1547 = vpop.permute.xlu0 %1546
    %1550 = vset.pattern.permute.xlu0 0
    %1551 = vperm.xlu0 %1550, %v1520
    %v1552 = vpop.permute.xlu0 %1551
    %1555 = vset.pattern.permute.xlu0 0
    %1556 = vperm.xlu0 %1555, %v1521
    %v1557 = vpop.permute.xlu0 %1556
    %1560 = vset.pattern.permute.xlu0 0
    %1561 = vperm.xlu0 %1560, %v1522
    %v1562 = vpop.permute.xlu0 %1561
    %1565 = vset.pattern.permute.xlu0 0
    %1566 = vperm.xlu0 %1565, %v1523
    %v1567 = vpop.permute.xlu0 %1566
    %1570 = vset.pattern.permute.xlu0 0
    %1571 = vperm.xlu0 %1570, %v1524
    %v1572 = vpop.permute.xlu0 %1571
    %1575 = vset.pattern.permute.xlu0 0
    %1576 = vperm.xlu0 %1575, %v1525
    %v1577 = vpop.permute.xlu0 %1576
    %1580 = vset.pattern.permute.xlu0 0
    %1581 = vperm.xlu0 %1580, %v1526
    %v1582 = vpop.permute.xlu0 %1581
    %1585 = vset.pattern.permute.xlu0 0
    %1586 = vperm.xlu0 %1585, %v1527
    %v1587 = vpop.permute.xlu0 %1586
    %1590 = vset.pattern.permute.xlu0 0
    %1591 = vperm.xlu0 %1590, %v1528
    %v1592 = vpop.permute.xlu0 %1591
    %vm1594 = vcmask 293888
    %v1596 = vsel %vm1594, %v1503, 0
    %v1599 = vsel %vm1594, %v1504, 0
    %v1602 = vsel %vm1594, %v1505, 0
    %v1605 = vsel %vm1594, %v1506, 0
    %v1608 = vsel %vm1594, %v1507, 0
    %v1611 = vsel %vm1594, %v1508, 0
    %v1614 = vsel %vm1594, %v1509, 0
    %v1617 = vsel %vm1594, %v1510, 0
    %v1620 = vsel %vm1594, %v1511, 0
    %v1623 = vsel %vm1594, %v1512, 0
    %v1626 = vsel %vm1594, %v1513, 0
    %v1629 = vsel %vm1594, %v1514, 0
    %v1632 = vsel %vm1594, %v1515, 0
    %v1635 = vsel %vm521, %v1502, 0
    %1637 = vmatprep.subr.mxu0 0.0
    %1638 = vmatpush1.msra.mxu0 0.0
    %1639 = vmatprep.subr.mxu0 0.0
    %1640 = vmatpush1.msra.mxu0 0.0
    %1641 = vmatprep.subr.mxu0 0.0
    %1642 = vmatpush1.msra.mxu0 0.0
    %1643 = vmatprep.subr.mxu0 0.0
    %1644 = vmatpush1.msra.mxu0 0.0
    %1645 = vmatprep.subr.mxu0 0.0
    %1646 = vmatpush1.msra.mxu0 0.0
    %1647 = vmatprep.subr.mxu0 0.0
    %1648 = vmatpush1.msra.mxu0 0.0
    %1649 = vmatprep.subr.mxu0 0.0
    %1650 = vmatpush1.msra.mxu0 0.0
    %1651 = vmatprep.subr.mxu0 0.0
    %1652 = vmatpush1.msra.mxu0 0.0
    %1653 = vmatprep.subr.mxu0 0.0
    %1654 = vmatpush1.msra.mxu0 0.0
    %1655 = vmatprep.subr.mxu0 0.0
    %1656 = vmatpush1.msra.mxu0 0.0
    %1657 = vmatprep.subr.mxu0 0.0
    %1658 = vmatpush1.msra.mxu0 0.0
    %1659 = vmatprep.subr.mxu0 0.0
    %1660 = vmatpush1.msra.mxu0 %v1635
    %1661 = vmatprep.subr.mxu0 0.0
    %1662 = vmatpush1.msra.mxu0 %v1501
    %1663 = vmatprep.subr.mxu0 0.0
    %1664 = vmatpush1.msra.mxu0 %v1500
    %1665 = vmatprep.subr.mxu0 0.0
    %1666 = vmatpush1.msra.mxu0 %v1499
    %1667 = vmatprep.subr.mxu0 0.0
    %1668 = vmatpush1.msra.mxu0 %v1498
    %1669 = vmatprep.subr.mxu0 0.0
    %1670 = vmatpush2.msra.mxu0 0.0
    %1671 = vmatprep.subr.mxu0 0.0
    %1672 = vmatpush2.msra.mxu0 0.0
    %1673 = vmatprep.subr.mxu0 0.0
    %1674 = vmatpush2.msra.mxu0 0.0
    %1675 = vmatprep.subr.mxu0 0.0
    %1676 = vmatpush2.msra.mxu0 0.0
    %1677 = vmatprep.subr.mxu0 0.0
    %1678 = vmatpush2.msra.mxu0 0.0
    %1679 = vmatprep.subr.mxu0 0.0
    %1680 = vmatpush2.msra.mxu0 0.0
    %1681 = vmatprep.subr.mxu0 0.0
    %1682 = vmatpush2.msra.mxu0 0.0
    %1683 = vmatprep.subr.mxu0 0.0
    %1684 = vmatpush2.msra.mxu0 0.0
    %1685 = vmatprep.subr.mxu0 0.0
    %1686 = vmatpush2.msra.mxu0 0.0
    %1687 = vmatprep.subr.mxu0 0.0
    %1688 = vmatpush2.msra.mxu0 0.0
    %1689 = vmatprep.subr.mxu0 0.0
    %1690 = vmatpush2.msra.mxu0 0.0
    %1691 = vmatprep.subr.mxu0 0.0
    %1692 = vmatpush2.msra.mxu0 0.0
    %1693 = vmatprep.subr.mxu0 0.0
    %1694 = vmatpush2.msra.mxu0 0.0
    %1695 = vmatprep.subr.mxu0 0.0
    %1696 = vmatpush2.msra.mxu0 0.0
    %1697 = vmatprep.subr.mxu0 0.0
    %1698 = vmatpush2.msra.mxu0 0.0
    %1699 = vmatprep.subr.mxu0 0.0
    %1700 = vmatpush2.msra.mxu0 0.0
    %1701 = vmatprep.mubr.f32.mxu0 0.0
    %1702 = vmatmul.mubr.f32.gmra.mxu0 %v1596
    %v1703 = vpop.f32.mrf.mxu0
    %v1704 = vadd.f32 %v1532, %v1703
    %v1705 = vpop.f32.mrf.mxu0
    %1706 = vmatprep.mubr.f32.mxu0 0.0
    %1707 = vmatmul.mubr.f32.gmra.mxu0 %v1599
    %v1708 = vpop.f32.mrf.mxu0
    %v1709 = vadd.f32 %v1537, %v1708
    %v1710 = vpop.f32.mrf.mxu0
    %1711 = vmatprep.mubr.f32.mxu0 0.0
    %1712 = vmatmul.mubr.f32.gmra.mxu0 %v1602
    %v1713 = vpop.f32.mrf.mxu0
    %v1714 = vadd.f32 %v1542, %v1713
    %v1715 = vpop.f32.mrf.mxu0
    %1716 = vmatprep.mubr.f32.mxu0 0.0
    %1717 = vmatmul.mubr.f32.gmra.mxu0 %v1605
    %v1718 = vpop.f32.mrf.mxu0
    %v1719 = vadd.f32 %v1547, %v1718
    %v1720 = vpop.f32.mrf.mxu0
    %1721 = vmatprep.mubr.f32.mxu0 0.0
    %1722 = vmatmul.mubr.f32.gmra.mxu0 %v1608
    %v1723 = vpop.f32.mrf.mxu0
    %v1724 = vadd.f32 %v1552, %v1723
    %v1725 = vpop.f32.mrf.mxu0
    %1726 = vmatprep.mubr.f32.mxu0 0.0
    %1727 = vmatmul.mubr.f32.gmra.mxu0 %v1611
    %v1728 = vpop.f32.mrf.mxu0
    %v1729 = vadd.f32 %v1557, %v1728
    %v1730 = vpop.f32.mrf.mxu0
    %1731 = vmatprep.mubr.f32.mxu0 0.0
    %1732 = vmatmul.mubr.f32.gmra.mxu0 %v1614
    %v1733 = vpop.f32.mrf.mxu0
    %v1734 = vadd.f32 %v1562, %v1733
    %v1735 = vpop.f32.mrf.mxu0
    %1736 = vmatprep.mubr.f32.mxu0 0.0
    %1737 = vmatmul.mubr.f32.gmra.mxu0 %v1617
    %v1738 = vpop.f32.mrf.mxu0
    %v1739 = vadd.f32 %v1567, %v1738
    %v1740 = vpop.f32.mrf.mxu0
    %1741 = vmatprep.mubr.f32.mxu0 0.0
    %1742 = vmatmul.mubr.f32.gmra.mxu0 %v1620
    %v1743 = vpop.f32.mrf.mxu0
    %v1744 = vadd.f32 %v1572, %v1743
    %v1745 = vpop.f32.mrf.mxu0
    %1746 = vmatprep.mubr.f32.mxu0 0.0
    %1747 = vmatmul.mubr.f32.gmra.mxu0 %v1623
    %v1748 = vpop.f32.mrf.mxu0
    %v1749 = vadd.f32 %v1577, %v1748
    %v1750 = vpop.f32.mrf.mxu0
    %1751 = vmatprep.mubr.f32.mxu0 0.0
    %1752 = vmatmul.mubr.f32.gmra.mxu0 %v1626
    %v1753 = vpop.f32.mrf.mxu0
    %v1754 = vadd.f32 %v1582, %v1753
    %v1755 = vpop.f32.mrf.mxu0
    %1756 = vmatprep.mubr.f32.mxu0 0.0
    %1757 = vmatmul.mubr.f32.gmra.mxu0 %v1629
    %v1758 = vpop.f32.mrf.mxu0
    %v1759 = vadd.f32 %v1587, %v1758
    %v1760 = vpop.f32.mrf.mxu0
    %1761 = vmatprep.mubr.f32.mxu0 0.0
    %1762 = vmatmul.mubr.f32.gmra.mxu0 %v1632
    %v1763 = vpop.f32.mrf.mxu0
    %v1764 = vadd.f32 %v1592, %v1763
    %v1765 = vpop.f32.mrf.mxu0
    %1766 = vdwg.mxu0
    %v1767 = vmax.f32 %v1704, 0.0
    %v1768 = vmax.f32 %v1709, 0.0
    %v1769 = vmax.f32 %v1714, 0.0
    %v1770 = vmax.f32 %v1719, 0.0
    %v1771 = vmax.f32 %v1724, 0.0
    %v1772 = vmax.f32 %v1729, 0.0
    %v1773 = vmax.f32 %v1734, 0.0
    %v1774 = vmax.f32 %v1739, 0.0
    %v1775 = vmax.f32 %v1744, 0.0
    %v1776 = vmax.f32 %v1749, 0.0
    %v1777 = vmax.f32 %v1754, 0.0
    %v1778 = vmax.f32 %v1759, 0.0
    %v1779 = vmax.f32 %v1764, 0.0
    %v1780 = vld [vmem:[%s6] sm:$0x1f]
    %v1781 = vld [vmem:[%s7] sm:$0x1f]
    %1783 = vset.pattern.permute.xlu0 0
    %1784 = vperm.xlu0 %1783, %v1781
    %v1785 = vpop.permute.xlu0 %1784
    %vm1787 = vcmask 818176
    %v1789 = vsel %vm1787, %v1780, 0
    %v1792 = vsel %vm521, %v1779, 0
    %1794 = vmatprep.subr.mxu0 0.0
    %1795 = vmatpush1.msra.mxu0 0.0
    %1796 = vmatprep.subr.mxu0 0.0
    %1797 = vmatpush1.msra.mxu0 0.0
    %1798 = vmatprep.subr.mxu0 0.0
    %1799 = vmatpush1.msra.mxu0 0.0
    %1800 = vmatprep.subr.mxu0 0.0
    %1801 = vmatpush1.msra.mxu0 %v1792
    %1802 = vmatprep.subr.mxu0 0.0
    %1803 = vmatpush1.msra.mxu0 %v1778
    %1804 = vmatprep.subr.mxu0 0.0
    %1805 = vmatpush1.msra.mxu0 %v1777
    %1806 = vmatprep.subr.mxu0 0.0
    %1807 = vmatpush1.msra.mxu0 %v1776
    %1808 = vmatprep.subr.mxu0 0.0
    %1809 = vmatpush1.msra.mxu0 %v1775
    %1810 = vmatprep.subr.mxu0 0.0
    %1811 = vmatpush1.msra.mxu0 %v1774
    %1812 = vmatprep.subr.mxu0 0.0
    %1813 = vmatpush1.msra.mxu0 %v1773
    %1814 = vmatprep.subr.mxu0 0.0
    %1815 = vmatpush1.msra.mxu0 %v1772
    %1816 = vmatprep.subr.mxu0 0.0
    %1817 = vmatpush1.msra.mxu0 %v1771
    %1818 = vmatprep.subr.mxu0 0.0
    %1819 = vmatpush1.msra.mxu0 %v1770
    %1820 = vmatprep.subr.mxu0 0.0
    %1821 = vmatpush1.msra.mxu0 %v1769
    %1822 = vmatprep.subr.mxu0 0.0
    %1823 = vmatpush1.msra.mxu0 %v1768
    %1824 = vmatprep.subr.mxu0 0.0
    %1825 = vmatpush1.msra.mxu0 %v1767
    %1826 = vmatprep.subr.mxu0 0.0
    %1827 = vmatpush2.msra.mxu0 0.0
    %1828 = vmatprep.subr.mxu0 0.0
    %1829 = vmatpush2.msra.mxu0 0.0
    %1830 = vmatprep.subr.mxu0 0.0
    %1831 = vmatpush2.msra.mxu0 0.0
    %1832 = vmatprep.subr.mxu0 0.0
    %1833 = vmatpush2.msra.mxu0 0.0
    %1834 = vmatprep.subr.mxu0 0.0
    %1835 = vmatpush2.msra.mxu0 0.0
    %1836 = vmatprep.subr.mxu0 0.0
    %1837 = vmatpush2.msra.mxu0 0.0
    %1838 = vmatprep.subr.mxu0 0.0
    %1839 = vmatpush2.msra.mxu0 0.0
    %1840 = vmatprep.subr.mxu0 0.0
    %1841 = vmatpush2.msra.mxu0 0.0
    %1842 = vmatprep.subr.mxu0 0.0
    %1843 = vmatpush2.msra.mxu0 0.0
    %1844 = vmatprep.subr.mxu0 0.0
    %1845 = vmatpush2.msra.mxu0 0.0
    %1846 = vmatprep.subr.mxu0 0.0
    %1847 = vmatpush2.msra.mxu0 0.0
    %1848 = vmatprep.subr.mxu0 0.0
    %1849 = vmatpush2.msra.mxu0 0.0
    %1850 = vmatprep.subr.mxu0 0.0
    %1851 = vmatpush2.msra.mxu0 0.0
    %1852 = vmatprep.subr.mxu0 0.0
    %1853 = vmatpush2.msra.mxu0 0.0
    %1854 = vmatprep.subr.mxu0 0.0
    %1855 = vmatpush2.msra.mxu0 0.0
    %1856 = vmatprep.subr.mxu0 0.0
    %1857 = vmatpush2.msra.mxu0 0.0
    %1858 = vmatprep.mubr.f32.mxu0 0.0
    %1859 = vmatmul.mubr.f32.gmra.mxu0 %v1789
    %v1860 = vpop.f32.mrf.mxu0
    %v1861 = vadd.f32 %v1785, %v1860
    %v1862 = vpop.f32.mrf.mxu0
    %1863 = vdwg.mxu0
    %v1864 = vsub.f32 0.0, %v1861
    %v1865 = vmul.f32 %v1864, 1.442695
    %v1866 = vpow.pop %v1865
    %v1867 = vadd.f32 %v1866, 1.0
    %v1868 = vrcp.pop %v1867
    %1869 = vst [vmem:[#allocation8] sm:$0x1f] %v1868
    // Predicated region
    $region42: #{tpu_custom_call.1} parent=1 // pred_check
      _
    $region43: #{tpu_custom_call.1} parent=1 // pred_check_branch
      %1871 = sbr.rel (0) target = $region45
    $region44: #{tpu_custom_call.1} parent=1 // pred_region
      %s1873 = ssub.s32 128, 128
      %1874 = vsyncadd [#allocation4], %s1873
      %s1876 = sshll.u32 [#allocation8], 4
      %s1877 = int_to_ptr.vmem [resolvable:$true] %s1876
      %1879 = dma.vmem_to_hbm [thread:$0]  %s1877, 128, %s8, [#allocation4]
    $region45: #{tpu_custom_call.1} parent=1 // pred_fallthru
      _
    // Predicated region
    $region46: #{tpu_custom_call.1} parent=1 // pred_check
      _
    $region47: #{tpu_custom_call.1} parent=1 // pred_check_branch
      %1881 = sbr.rel (0) target = $region49
    $region48: #{tpu_custom_call.1} parent=1 // pred_region
      %1882 = dma.done [#allocation4], 128
    $region49: #{tpu_custom_call.1} parent=1 // pred_fallthru
      _
    %1883 = vsyncpa [#allocation4], 1
    %1884 = vsyncpa [#allocation5], 1
    %1885 = vsyncpa [#allocation7], 1

</llo_original>
